<compile_context>
chip_gen: v5e
topology: v5e:2x2
jax: 0.10.0
libtpu: 0.0.40
codegen_flags: <defaults>
</compile_context>

<pallas_src>
import functools

import jax
import jax.numpy as jnp
import numpy as np
from jax import lax
from jax.experimental import pallas as pl
from jax.experimental.pallas import tpu as pltpu


def _cdiv(a, b):
    return -(-a // b)


def _choose_lane_tile(gg, batch, *, min_steps=4, max_lanes=1024, pref_floor=512):
    """Lane tile for the flattened spatial axis.

    Multiple of 128 (or == gg when gg <= 128 so block == full dim), targeting 512-1024 lanes,
    shrunk (but not below ~512 / 128 for tiny grids) until batch * num_tiles >= min_steps so the
    DMA pipeline overlaps and v7x's two TensorCores both get work.
    """
    if gg <= 128:
        return gg
    tl = min(max_lanes, (gg // 128) * 128)
    floor = min(pref_floor, tl)
    while tl - 128 >= floor and batch * _cdiv(gg, tl) < min_steps:
        tl -= 128
    return tl


def _decode_kernel_channels_last(x_ref, go_ref, awh_ref, o_ref, *, stride):
    """Decode one (batch, lane-chunk) tile, all anchors, writing channel-minor output.

    x_ref:   VMEM (A, C5, TL) raw predictions (native dtype), lane = flattened spatial.
    go_ref:  VMEM (2, 1, TL)  grid offsets pre-scaled by stride: [0]=x (col*stride), [1]=y.
    awh_ref: VMEM (A, 2, 1)   anchor (w, h) in pixels.
    o_ref:   VMEM (A, TL, C5) decoded, channel-minor (torch) layout:
             c in {0,1}: sigmoid(p)*stride + grid*stride
             c in {2,3}: exp(p) * anchor
             c >= 4    : sigmoid(p)
    """
    pred = x_ref[...].astype(jnp.float32)                    # (A, C5, TL)
    a, c5, tl = pred.shape

    # Whole-tile sigmoid (channels 0,1,4.. consume it; 2,3 are overwritten below).
    sig = jax.nn.sigmoid(pred)
    c_idx = lax.broadcasted_iota(jnp.int32, (a, c5, tl), 1)
    off = jnp.where(c_idx == 0, go_ref[0:1], go_ref[1:2])    # (A, C5, TL) via broadcast
    main = jnp.where(c_idx < 2, sig * stride + off, sig)

    # exp only on the two w/h sublane rows (EUP savings grows with num_classes).
    wh = jnp.exp(pred[:, 2:4, :]) * awh_ref[...]             # (A, 2, TL)

    # On-chip relayout to channel-minor; A is small and static, so unroll per anchor.
    for ai in range(a):
        o_ref[ai, :, :] = jnp.transpose(main[ai]).astype(o_ref.dtype)    # (TL, C5)
        o_ref[ai, :, 2:4] = jnp.transpose(wh[ai]).astype(o_ref.dtype)    # (TL, 2)


def _decode_kernel_lane_dense(x_ref, go_ref, whm_ref, o_ref, *, stride):
    """Fallback: same math, lane-dense (A, C5, TL) output (previously validated formulation)."""
    pred = x_ref[...].astype(jnp.float32)                    # (A, C5, TL)
    a, c5, tl = pred.shape
    sig = jax.nn.sigmoid(pred)
    expv = jnp.exp(pred)
    c_idx = lax.broadcasted_iota(jnp.int32, (a, c5, tl), 1)
    off = jnp.where(c_idx == 0, go_ref[0:1], go_ref[1:2])
    out = jnp.where(c_idx < 2, sig * stride + off,
                    jnp.where(c_idx < 4, expv * whm_ref[...], sig))
    o_ref[...] = out.astype(o_ref.dtype)


def _decode_channels_last(xr, go, awh, *, stride, tl, out_dtype):
    B, A, C5, GG = xr.shape
    nt = _cdiv(GG, tl)
    kernel = functools.partial(_decode_kernel_channels_last, stride=stride)
    return pl.pallas_call(
        kernel,
        out_shape=jax.ShapeDtypeStruct((B, A, GG, C5), out_dtype),
        grid=(B, nt),
        in_specs=[
            pl.BlockSpec((None, A, C5, tl), lambda b, t: (b, 0, 0, t)),   # predictions
            pl.BlockSpec((2, 1, tl), lambda b, t: (0, 0, t)),             # grid*stride table
            pl.BlockSpec((A, 2, 1), lambda b, t: (0, 0, 0)),              # anchor (w, h)
        ],
        out_specs=pl.BlockSpec((None, A, tl, C5), lambda b, t: (b, 0, t, 0)),
        compiler_params=pltpu.CompilerParams(
            dimension_semantics=("parallel", "parallel")),
    )(xr, go, awh)


def _decode_lane_dense(xr, go, whm, *, stride, tl, out_dtype):
    B, A, C5, GG = xr.shape
    nt = _cdiv(GG, tl)
    kernel = functools.partial(_decode_kernel_lane_dense, stride=stride)
    return pl.pallas_call(
        kernel,
        out_shape=jax.ShapeDtypeStruct((B, A, C5, GG), out_dtype),
        grid=(B, nt),
        in_specs=[
            pl.BlockSpec((None, A, C5, tl), lambda b, t: (b, 0, 0, t)),
            pl.BlockSpec((2, 1, tl), lambda b, t: (0, 0, t)),
            pl.BlockSpec((A, C5, 1), lambda b, t: (0, 0, 0)),
        ],
        out_specs=pl.BlockSpec((None, A, C5, tl), lambda b, t: (b, 0, 0, t)),
        compiler_params=pltpu.CompilerParams(
            dimension_semantics=("parallel", "parallel")),
    )(xr, go, whm)


def detection_layer(x, anchors, num_classes, img_size, out_dtype=jnp.float32):
    """Pallas implementation of DetectionLayer.forward(x, targets=None, img_size=img_size).

    Returns (output, 0) with output shaped (B, A*G*G, 5+num_classes), like the torch module.
    Pass out_dtype=jnp.bfloat16 if the downstream consumer tolerates it (halves write traffic).
    """
    B, C, G, G2 = x.shape
    assert G == G2, "expected square spatial grid"
    A = anchors.shape[0]
    C5 = num_classes + 5
    assert C == A * C5
    stride = img_size // G                                    # torch: img_size // grid_size

    GG = G * G
    xr = x.reshape(B, A, C5, GG)                              # free row-major reshape, no pad

    # Compile-time grid-offset table, pre-scaled by stride: p = i*G + j -> (j*stride, i*stride).
    lin = np.arange(GG)
    go = jnp.asarray(
        np.stack([(lin % G).astype(np.float32) * float(stride),
                  (lin // G).astype(np.float32) * float(stride)], axis=0)
    ).reshape(2, 1, GG)

    # exp(w) * (a/stride) * stride == exp(w) * a -> use anchors (pixels) directly.
    awh = anchors.astype(jnp.float32).reshape(A, 2, 1)

    TL = _choose_lane_tile(GG, B)

    try:
        out = _decode_channels_last(xr, go, awh, stride=float(stride), tl=TL,
                                    out_dtype=out_dtype)
        out = jax.block_until_ready(out)                      # surface lowering/runtime errors here
        return out.reshape(B, A * GG, C5), 0
    except Exception:
        # TODO(synk): robustness fallback for toolchains that cannot lower the in-kernel
        # (C5, TL)->(TL, C5) relayout; pays one extra HBM pass for the XLA transpose.
        whm = jnp.ones((A, C5), jnp.float32)
        whm = whm.at[:, 2].set(anchors[:, 0].astype(jnp.float32))
        whm = whm.at[:, 3].set(anchors[:, 1].astype(jnp.float32))
        out = _decode_lane_dense(xr, go, whm.reshape(A, C5, 1),
                                 stride=float(stride), tl=TL, out_dtype=out_dtype)
        out = out.transpose(0, 1, 3, 2).reshape(B, A * GG, C5)
        return out, 0

    # TODO(synk): training branch (build_targets + MSE/BCE losses + metrics) not implemented;
    # forward with targets=None returns (output, 0), which is what we reproduce here.


def _reference(x, anchors, num_classes, img_size):
    """Pure-JAX reference mirroring the PyTorch forward (targets=None)."""
    B, C, G, _ = x.shape
    A = anchors.shape[0]
    C5 = num_classes + 5
    stride = img_size // G
    pred = x.reshape(B, A, C5, G, G).transpose(0, 1, 3, 4, 2)    # (B, A, G, G, C5)
    sx = jax.nn.sigmoid(pred[..., 0])
    sy = jax.nn.sigmoid(pred[..., 1])
    w = pred[..., 2]
    h = pred[..., 3]
    conf = jax.nn.sigmoid(pred[..., 4])
    cls = jax.nn.sigmoid(pred[..., 5:])
    grid_x = jnp.arange(G, dtype=jnp.float32).reshape(1, 1, 1, G)
    grid_y = jnp.arange(G, dtype=jnp.float32).reshape(1, 1, G, 1)
    sa = anchors.astype(jnp.float32) / stride
    aw = sa[:, 0].reshape(1, A, 1, 1)
    ah = sa[:, 1].reshape(1, A, 1, 1)
    boxes = jnp.stack([sx + grid_x, sy + grid_y, jnp.exp(w) * aw, jnp.exp(h) * ah], axis=-1)
    return jnp.concatenate(
        [boxes.reshape(B, -1, 4) * stride,
         conf.reshape(B, -1, 1),
         cls.reshape(B, -1, num_classes)], axis=-1)


if __name__ == "__main__":
    anchors = jnp.array([[10.0, 13.0], [16.0, 30.0], [33.0, 23.0]], dtype=jnp.float32)
    num_classes = 2
    num_anchors = anchors.shape[0]
    img_size = 416
    C = num_anchors * (num_classes + 5)                          # 21

    key = jax.random.PRNGKey(0)
    # G=16: lane-aligned spatial dim (GG=256). G=13: exercises the ragged (GG=169) last tile
    # that replaced the old padding path.
    for B, G in [(2, 16), (2, 13)]:
        key, sub = jax.random.split(key)
        x = jax.random.normal(sub, (B, C, G, G), dtype=jnp.float32)  # NCHW like the torch module

        out, loss = detection_layer(x, anchors, num_classes, img_size)
        out = jax.block_until_ready(out)

        ref = jax.block_until_ready(_reference(x, anchors, num_classes, img_size))
        np.testing.assert_allclose(np.asarray(out), np.asarray(ref), rtol=1e-5, atol=1e-5)
        assert out.shape == (B, num_anchors * G * G, num_classes + 5)
        assert loss == 0

    print("KERNEL_OK")
</pallas_src>

<mosaic_0001>
module attributes {stable_mosaic.version = 11 : i64} {
  func.func @_decode_kernel_channels_last(%arg0: i32, %arg1: i32, %arg2: memref<1x3x7x256xf32, #tpu.memory_space<vmem>>, %arg3: memref<2x1x256xf32, #tpu.memory_space<vmem>>, %arg4: memref<3x2x1xf32, #tpu.memory_space<vmem>>, %arg5: memref<1x3x256x7xf32, #tpu.memory_space<vmem>>) attributes {dimension_semantics = [#tpu.dimension_semantics<parallel>, #tpu.dimension_semantics<parallel>], iteration_bounds = array<i64: 2, 1>, scalar_prefetch = 0 : i64, scratch_operands = 0 : i64, tpu.core_type = #tpu.core_type<tc>, window_params = [{transform_indices = @transform_0, window_bounds = array<i64: 1, 3, 7, 256>}, {transform_indices = @transform_1, window_bounds = array<i64: 2, 1, 256>}, {pipeline_mode = #tpu.pipeline_mode<synchronous>, transform_indices = @transform_2, window_bounds = array<i64: 3, 2, 1>}, {transform_indices = @transform_3, window_bounds = array<i64: 1, 3, 256, 7>}]} {
    %c0 = arith.constant 0 : index
    %c0_0 = arith.constant 0 : index
    %c0_1 = arith.constant 0 : index
    %c0_2 = arith.constant 0 : index
    %0 = vector.load %arg2[%c0, %c0_0, %c0_1, %c0_2] : memref<1x3x7x256xf32, #tpu.memory_space<vmem>>, vector<1x3x7x256xf32>
    %1 = vector.shape_cast %0 : vector<1x3x7x256xf32> to vector<3x7x256xf32>
    %2 = arith.negf %1 : vector<3x7x256xf32>
    %3 = math.exp %2 : vector<3x7x256xf32>
    %cst = arith.constant 1.000000e+00 : f32
    %4 = vector.broadcast %cst : f32 to vector<3x7x256xf32>
    %5 = arith.addf %4, %3 : vector<3x7x256xf32>
    %6 = arith.divf %4, %5 : vector<3x7x256xf32>
    %7 = tpu.iota {dimensions = array<i32: 1>} : vector<3x7x256xi32>
    %c0_i32 = arith.constant 0 : i32
    %8 = vector.broadcast %c0_i32 : i32 to vector<3x7x256xi32>
    %9 = arith.cmpi eq, %7, %8 : vector<3x7x256xi32>
    %c0_3 = arith.constant 0 : index
    %c0_4 = arith.constant 0 : index
    %c0_5 = arith.constant 0 : index
    %10 = vector.load %arg3[%c0_3, %c0_4, %c0_5] : memref<2x1x256xf32, #tpu.memory_space<vmem>>, vector<1x1x256xf32>
    %c1 = arith.constant 1 : index
    %c0_6 = arith.constant 0 : index
    %c0_7 = arith.constant 0 : index
    %11 = vector.load %arg3[%c1, %c0_6, %c0_7] : memref<2x1x256xf32, #tpu.memory_space<vmem>>, vector<1x1x256xf32>
    %12 = vector.shape_cast %10 : vector<1x1x256xf32> to vector<1x1x256xf32>
    %13 = vector.broadcast %12 : vector<1x1x256xf32> to vector<3x7x256xf32>
    %14 = vector.shape_cast %11 : vector<1x1x256xf32> to vector<1x1x256xf32>
    %15 = vector.broadcast %14 : vector<1x1x256xf32> to vector<3x7x256xf32>
    %16 = arith.select %9, %13, %15 : vector<3x7x256xi1>, vector<3x7x256xf32>
    %c2_i32 = arith.constant 2 : i32
    %17 = vector.broadcast %c2_i32 : i32 to vector<3x7x256xi32>
    %18 = arith.cmpi slt, %7, %17 : vector<3x7x256xi32>
    %cst_8 = arith.constant 2.600000e+01 : f32
    %19 = vector.broadcast %cst_8 : f32 to vector<3x7x256xf32>
    %20 = arith.mulf %6, %19 : vector<3x7x256xf32>
    %21 = arith.addf %20, %16 : vector<3x7x256xf32>
    %22 = arith.select %18, %21, %6 : vector<3x7x256xi1>, vector<3x7x256xf32>
    %23 = vector.extract_strided_slice %1 {offsets = [0, 2, 0], sizes = [3, 2, 256], strides = [1, 1, 1]} : vector<3x7x256xf32> to vector<3x2x256xf32>
    %24 = math.exp %23 : vector<3x2x256xf32>
    %c0_9 = arith.constant 0 : index
    %c0_10 = arith.constant 0 : index
    %c0_11 = arith.constant 0 : index
    %25 = vector.load %arg4[%c0_9, %c0_10, %c0_11] : memref<3x2x1xf32, #tpu.memory_space<vmem>>, vector<3x2x1xf32>
    %26 = vector.broadcast %25 : vector<3x2x1xf32> to vector<3x2x256xf32>
    %27 = arith.mulf %24, %26 : vector<3x2x256xf32>
    %28 = vector.extract_strided_slice %22 {offsets = [0, 0, 0], sizes = [1, 7, 256], strides = [1, 1, 1]} : vector<3x7x256xf32> to vector<1x7x256xf32>
    %29 = vector.shape_cast %28 : vector<1x7x256xf32> to vector<7x256xf32>
    %30 = tpu.transpose %29, [1, 0] : vector<7x256xf32> -> vector<256x7xf32>
    %c0_12 = arith.constant 0 : index
    %c0_13 = arith.constant 0 : index
    %c0_14 = arith.constant 0 : index
    %c0_15 = arith.constant 0 : index
    %31 = vector.load %arg5[%c0_12, %c0_13, %c0_14, %c0_15] : memref<1x3x256x7xf32, #tpu.memory_space<vmem>>, vector<1x1x256x7xf32>
    %32 = vector.shape_cast %31 : vector<1x1x256x7xf32> to vector<256x7xf32>
    %33 = vector.shape_cast %30 : vector<256x7xf32> to vector<1x1x256x7xf32>
    tpu.vector_store %arg5[%c0_12, %c0_13, %c0_14, %c0_15], %33 {strides = array<i32>} : memref<1x3x256x7xf32, #tpu.memory_space<vmem>>, vector<1x1x256x7xf32>,
    %34 = vector.extract_strided_slice %27 {offsets = [0, 0, 0], sizes = [1, 2, 256], strides = [1, 1, 1]} : vector<3x2x256xf32> to vector<1x2x256xf32>
    %35 = vector.shape_cast %34 : vector<1x2x256xf32> to vector<2x256xf32>
    %36 = tpu.transpose %35, [1, 0] : vector<2x256xf32> -> vector<256x2xf32>
    %c0_16 = arith.constant 0 : index
    %c0_17 = arith.constant 0 : index
    %c0_18 = arith.constant 0 : index
    %c2 = arith.constant 2 : index
    %37 = vector.load %arg5[%c0_16, %c0_17, %c0_18, %c2] : memref<1x3x256x7xf32, #tpu.memory_space<vmem>>, vector<1x1x256x2xf32>
    %38 = vector.shape_cast %37 : vector<1x1x256x2xf32> to vector<256x2xf32>
    %39 = vector.shape_cast %36 : vector<256x2xf32> to vector<1x1x256x2xf32>
    tpu.vector_store %arg5[%c0_16, %c0_17, %c0_18, %c2], %39 {strides = array<i32>} : memref<1x3x256x7xf32, #tpu.memory_space<vmem>>, vector<1x1x256x2xf32>,
    %40 = vector.extract_strided_slice %22 {offsets = [1, 0, 0], sizes = [1, 7, 256], strides = [1, 1, 1]} : vector<3x7x256xf32> to vector<1x7x256xf32>
    %41 = vector.shape_cast %40 : vector<1x7x256xf32> to vector<7x256xf32>
    %42 = tpu.transpose %41, [1, 0] : vector<7x256xf32> -> vector<256x7xf32>
    %c0_19 = arith.constant 0 : index
    %c1_20 = arith.constant 1 : index
    %c0_21 = arith.constant 0 : index
    %c0_22 = arith.constant 0 : index
    %43 = vector.load %arg5[%c0_19, %c1_20, %c0_21, %c0_22] : memref<1x3x256x7xf32, #tpu.memory_space<vmem>>, vector<1x1x256x7xf32>
    %44 = vector.shape_cast %43 : vector<1x1x256x7xf32> to vector<256x7xf32>
    %45 = vector.shape_cast %42 : vector<256x7xf32> to vector<1x1x256x7xf32>
    tpu.vector_store %arg5[%c0_19, %c1_20, %c0_21, %c0_22], %45 {strides = array<i32>} : memref<1x3x256x7xf32, #tpu.memory_space<vmem>>, vector<1x1x256x7xf32>,
    %46 = vector.extract_strided_slice %27 {offsets = [1, 0, 0], sizes = [1, 2, 256], strides = [1, 1, 1]} : vector<3x2x256xf32> to vector<1x2x256xf32>
    %47 = vector.shape_cast %46 : vector<1x2x256xf32> to vector<2x256xf32>
    %48 = tpu.transpose %47, [1, 0] : vector<2x256xf32> -> vector<256x2xf32>
    %c0_23 = arith.constant 0 : index
    %c1_24 = arith.constant 1 : index
    %c0_25 = arith.constant 0 : index
    %c2_26 = arith.constant 2 : index
    %49 = vector.load %arg5[%c0_23, %c1_24, %c0_25, %c2_26] : memref<1x3x256x7xf32, #tpu.memory_space<vmem>>, vector<1x1x256x2xf32>
    %50 = vector.shape_cast %49 : vector<1x1x256x2xf32> to vector<256x2xf32>
    %51 = vector.shape_cast %48 : vector<256x2xf32> to vector<1x1x256x2xf32>
    tpu.vector_store %arg5[%c0_23, %c1_24, %c0_25, %c2_26], %51 {strides = array<i32>} : memref<1x3x256x7xf32, #tpu.memory_space<vmem>>, vector<1x1x256x2xf32>,
    %52 = vector.extract_strided_slice %22 {offsets = [2, 0, 0], sizes = [1, 7, 256], strides = [1, 1, 1]} : vector<3x7x256xf32> to vector<1x7x256xf32>
    %53 = vector.shape_cast %52 : vector<1x7x256xf32> to vector<7x256xf32>
    %54 = tpu.transpose %53, [1, 0] : vector<7x256xf32> -> vector<256x7xf32>
    %c0_27 = arith.constant 0 : index
    %c2_28 = arith.constant 2 : index
    %c0_29 = arith.constant 0 : index
    %c0_30 = arith.constant 0 : index
    %55 = vector.load %arg5[%c0_27, %c2_28, %c0_29, %c0_30] : memref<1x3x256x7xf32, #tpu.memory_space<vmem>>, vector<1x1x256x7xf32>
    %56 = vector.shape_cast %55 : vector<1x1x256x7xf32> to vector<256x7xf32>
    %57 = vector.shape_cast %54 : vector<256x7xf32> to vector<1x1x256x7xf32>
    tpu.vector_store %arg5[%c0_27, %c2_28, %c0_29, %c0_30], %57 {strides = array<i32>} : memref<1x3x256x7xf32, #tpu.memory_space<vmem>>, vector<1x1x256x7xf32>,
    %58 = vector.extract_strided_slice %27 {offsets = [2, 0, 0], sizes = [1, 2, 256], strides = [1, 1, 1]} : vector<3x2x256xf32> to vector<1x2x256xf32>
    %59 = vector.shape_cast %58 : vector<1x2x256xf32> to vector<2x256xf32>
    %60 = tpu.transpose %59, [1, 0] : vector<2x256xf32> -> vector<256x2xf32>
    %c0_31 = arith.constant 0 : index
    %c2_32 = arith.constant 2 : index
    %c0_33 = arith.constant 0 : index
    %c2_34 = arith.constant 2 : index
    %61 = vector.load %arg5[%c0_31, %c2_32, %c0_33, %c2_34] : memref<1x3x256x7xf32, #tpu.memory_space<vmem>>, vector<1x1x256x2xf32>
    %62 = vector.shape_cast %61 : vector<1x1x256x2xf32> to vector<256x2xf32>
    %63 = vector.shape_cast %60 : vector<256x2xf32> to vector<1x1x256x2xf32>
    tpu.vector_store %arg5[%c0_31, %c2_32, %c0_33, %c2_34], %63 {strides = array<i32>} : memref<1x3x256x7xf32, #tpu.memory_space<vmem>>, vector<1x1x256x2xf32>,
    return
  }
  func.func @transform_0(%arg0: i32, %arg1: i32) -> (i32, i32, i32, i32) {
    %c0_i32 = arith.constant 0 : i32
    %c0_i32_0 = arith.constant 0 : i32
    %c0_i32_1 = arith.constant 0 : i32
    return %arg0, %c0_i32, %c0_i32_0, %arg1 : i32, i32, i32, i32
  }
  func.func @transform_1(%arg0: i32, %arg1: i32) -> (i32, i32, i32) {
    %c0_i32 = arith.constant 0 : i32
    %c0_i32_0 = arith.constant 0 : i32
    %c0_i32_1 = arith.constant 0 : i32
    return %c0_i32, %c0_i32_0, %arg1 : i32, i32, i32
  }
  func.func @transform_2(%arg0: i32, %arg1: i32) -> (i32, i32, i32) {
    %c0_i32 = arith.constant 0 : i32
    %c0_i32_0 = arith.constant 0 : i32
    %c0_i32_1 = arith.constant 0 : i32
    %c0_i32_2 = arith.constant 0 : i32
    return %c0_i32, %c0_i32_0, %c0_i32_1 : i32, i32, i32
  }
  func.func @transform_3(%arg0: i32, %arg1: i32) -> (i32, i32, i32, i32) {
    %c0_i32 = arith.constant 0 : i32
    %c0_i32_0 = arith.constant 0 : i32
    %c0_i32_1 = arith.constant 0 : i32
    return %arg0, %c0_i32, %arg1, %c0_i32_0 : i32, i32, i32, i32
  }
}

module attributes {stable_mosaic.version = 11 : i64} {
  func.func @_decode_kernel_lane_dense(%arg0: i32, %arg1: i32, %arg2: memref<1x3x7x256xf32, #tpu.memory_space<vmem>>, %arg3: memref<2x1x256xf32, #tpu.memory_space<vmem>>, %arg4: memref<3x7x1xf32, #tpu.memory_space<vmem>>, %arg5: memref<1x3x7x256xf32, #tpu.memory_space<vmem>>) attributes {dimension_semantics = [#tpu.dimension_semantics<parallel>, #tpu.dimension_semantics<parallel>], iteration_bounds = array<i64: 2, 1>, scalar_prefetch = 0 : i64, scratch_operands = 0 : i64, tpu.core_type = #tpu.core_type<tc>, window_params = [{transform_indices = @transform_0, window_bounds = array<i64: 1, 3, 7, 256>}, {transform_indices = @transform_1, window_bounds = array<i64: 2, 1, 256>}, {pipeline_mode = #tpu.pipeline_mode<synchronous>, transform_indices = @transform_2, window_bounds = array<i64: 3, 7, 1>}, {transform_indices = @transform_3, window_bounds = array<i64: 1, 3, 7, 256>}]} {
    %c0 = arith.constant 0 : index
    %c0_0 = arith.constant 0 : index
    %c0_1 = arith.constant 0 : index
    %c0_2 = arith.constant 0 : index
    %0 = vector.load %arg2[%c0, %c0_0, %c0_1, %c0_2] : memref<1x3x7x256xf32, #tpu.memory_space<vmem>>, vector<1x3x7x256xf32>
    %1 = vector.shape_cast %0 : vector<1x3x7x256xf32> to vector<3x7x256xf32>
    %2 = arith.negf %1 : vector<3x7x256xf32>
    %3 = math.exp %2 : vector<3x7x256xf32>
    %cst = arith.constant 1.000000e+00 : f32
    %4 = vector.broadcast %cst : f32 to vector<3x7x256xf32>
    %5 = arith.addf %4, %3 : vector<3x7x256xf32>
    %6 = arith.divf %4, %5 : vector<3x7x256xf32>
    %7 = math.exp %1 : vector<3x7x256xf32>
    %8 = tpu.iota {dimensions = array<i32: 1>} : vector<3x7x256xi32>
    %c0_i32 = arith.constant 0 : i32
    %9 = vector.broadcast %c0_i32 : i32 to vector<3x7x256xi32>
    %10 = arith.cmpi eq, %8, %9 : vector<3x7x256xi32>
    %c0_3 = arith.constant 0 : index
    %c0_4 = arith.constant 0 : index
    %c0_5 = arith.constant 0 : index
    %11 = vector.load %arg3[%c0_3, %c0_4, %c0_5] : memref<2x1x256xf32, #tpu.memory_space<vmem>>, vector<1x1x256xf32>
    %c1 = arith.constant 1 : index
    %c0_6 = arith.constant 0 : index
    %c0_7 = arith.constant 0 : index
    %12 = vector.load %arg3[%c1, %c0_6, %c0_7] : memref<2x1x256xf32, #tpu.memory_space<vmem>>, vector<1x1x256xf32>
    %13 = vector.shape_cast %11 : vector<1x1x256xf32> to vector<1x1x256xf32>
    %14 = vector.broadcast %13 : vector<1x1x256xf32> to vector<3x7x256xf32>
    %15 = vector.shape_cast %12 : vector<1x1x256xf32> to vector<1x1x256xf32>
    %16 = vector.broadcast %15 : vector<1x1x256xf32> to vector<3x7x256xf32>
    %17 = arith.select %10, %14, %16 : vector<3x7x256xi1>, vector<3x7x256xf32>
    %c2_i32 = arith.constant 2 : i32
    %18 = vector.broadcast %c2_i32 : i32 to vector<3x7x256xi32>
    %19 = arith.cmpi slt, %8, %18 : vector<3x7x256xi32>
    %cst_8 = arith.constant 2.600000e+01 : f32
    %20 = vector.broadcast %cst_8 : f32 to vector<3x7x256xf32>
    %21 = arith.mulf %6, %20 : vector<3x7x256xf32>
    %22 = arith.addf %21, %17 : vector<3x7x256xf32>
    %c4_i32 = arith.constant 4 : i32
    %23 = vector.broadcast %c4_i32 : i32 to vector<3x7x256xi32>
    %24 = arith.cmpi slt, %8, %23 : vector<3x7x256xi32>
    %c0_9 = arith.constant 0 : index
    %c0_10 = arith.constant 0 : index
    %c0_11 = arith.constant 0 : index
    %25 = vector.load %arg4[%c0_9, %c0_10, %c0_11] : memref<3x7x1xf32, #tpu.memory_space<vmem>>, vector<3x7x1xf32>
    %26 = vector.broadcast %25 : vector<3x7x1xf32> to vector<3x7x256xf32>
    %27 = arith.mulf %7, %26 : vector<3x7x256xf32>
    %28 = arith.select %24, %27, %6 : vector<3x7x256xi1>, vector<3x7x256xf32>
    %29 = arith.select %19, %22, %28 : vector<3x7x256xi1>, vector<3x7x256xf32>
    %c0_12 = arith.constant 0 : index
    %c0_13 = arith.constant 0 : index
    %c0_14 = arith.constant 0 : index
    %c0_15 = arith.constant 0 : index
    %30 = vector.load %arg5[%c0_12, %c0_13, %c0_14, %c0_15] : memref<1x3x7x256xf32, #tpu.memory_space<vmem>>, vector<1x3x7x256xf32>
    %31 = vector.shape_cast %30 : vector<1x3x7x256xf32> to vector<3x7x256xf32>
    %32 = vector.shape_cast %29 : vector<3x7x256xf32> to vector<1x3x7x256xf32>
    tpu.vector_store %arg5[%c0_12, %c0_13, %c0_14, %c0_15], %32 {strides = array<i32>} : memref<1x3x7x256xf32, #tpu.memory_space<vmem>>, vector<1x3x7x256xf32>,
    return
  }
  func.func @transform_0(%arg0: i32, %arg1: i32) -> (i32, i32, i32, i32) {
    %c0_i32 = arith.constant 0 : i32
    %c0_i32_0 = arith.constant 0 : i32
    %c0_i32_1 = arith.constant 0 : i32
    return %arg0, %c0_i32, %c0_i32_0, %arg1 : i32, i32, i32, i32
  }
  func.func @transform_1(%arg0: i32, %arg1: i32) -> (i32, i32, i32) {
    %c0_i32 = arith.constant 0 : i32
    %c0_i32_0 = arith.constant 0 : i32
    %c0_i32_1 = arith.constant 0 : i32
    return %c0_i32, %c0_i32_0, %arg1 : i32, i32, i32
  }
  func.func @transform_2(%arg0: i32, %arg1: i32) -> (i32, i32, i32) {
    %c0_i32 = arith.constant 0 : i32
    %c0_i32_0 = arith.constant 0 : i32
    %c0_i32_1 = arith.constant 0 : i32
    %c0_i32_2 = arith.constant 0 : i32
    return %c0_i32, %c0_i32_0, %c0_i32_1 : i32, i32, i32
  }
  func.func @transform_3(%arg0: i32, %arg1: i32) -> (i32, i32, i32, i32) {
    %c0_i32 = arith.constant 0 : i32
    %c0_i32_0 = arith.constant 0 : i32
    %c0_i32_1 = arith.constant 0 : i32
    return %arg0, %c0_i32, %c0_i32_0, %arg1 : i32, i32, i32, i32
  }
}

</mosaic_0001>

<llo_original>
// kernel: tpu_custom_call.1
$region0: #{tpu_custom_call.1}
  #allocation0 [shape = 'u32[]', space=smem, size = 0x4, offset = 0x4, fixed_abs, tag = 'smem constant byte address 0x4 - core index']
  #allocation1 [shape = 'u32[72,128]{1,0:T(1,128)}', space=vmem, size = 0x9000, scoped, tag = 'internal scratch']
  %s0 = inlined_call_operand.vmem [shape: f32[2,3,7,256], index: 0, kind: input, shape index: {}]
  %s1 = inlined_call_operand.vmem [shape: f32[2,1,256], index: 1, kind: input, shape index: {}]
  %s2 = inlined_call_operand.vmem [shape: f32[3,2,1], index: 2, kind: input, shape index: {}]
  %s3 = inlined_call_operand.vmem [shape: f32[2,3,256,7], index: 3, kind: output, shape index: {}]
  %s4 = sld [smem:[#allocation0]]
  $region45: #{tpu_custom_call.1} parent=0
    _
  %s6 = ssub.s32 1, %s4
  %s7 = scalar_select 0, %s6, %s4
  loop: start=0, step=1, limit=4
  $region2: #{tpu_custom_call.1} parent=0 // loop_pre_header
    _
  $region3: #{tpu_custom_call.1} parent=0 // loop_header
    %s9 = sphi 0, %s13
    %p10 = scmp.ge.s32.totalorder %s9, 4
    %s16 = sphi 0, %s28
    %s17 = sphi 0, %s24
    %s18 = sphi 0, %s16
    %s19 = sphi 0, %s17
    %s20 = sphi 0, %s18
    %s21 = sphi 0, %s19
    %s33 = sphi 0, %s35
    %s36 = sphi 0, %s33
    %s37 = sphi 0, %s36
    %s53 = sphi 0, %s37
    %s59 = sphi 0, %s61
    %s62 = sphi 0, %s59
    %s63 = sphi 0, %s62
    %s79 = sphi 0, %s63
    %s83 = sphi 0, %s83
    %s85 = sphi 0, %s83
    %s86 = sphi 0, %s85
    %s100 = sphi 0, %s86
    %s108 = sphi 0, %s110
    %s111 = sphi 0, %s108
    %s112 = sphi 0, %s111
    %s128 = sphi 0, %s112
  $region4: #{tpu_custom_call.1} parent=0 // loop_header_branch
    %12 = sbr.rel (%p10) target = $region8
  $region5: #{tpu_custom_call.1} parent=0 // loop_body
    %s14 = ssub.s32 %s9, 1
    %s15 = ssub.s32 %s9, 2
    %s22 = sadd.s32 1, %s17
    %p23 = scmp.ge.s32.totalorder %s22, 1
    %s24 = scalar_select %p23, 0, %s22
    %s25 = sadd.s32 1, %s16
    %s26 = scalar_select %p23, %s25, %s16
    %p27 = scmp.ge.s32.totalorder %s26, 2
    %s28 = scalar_select %p27, 0, %s26
    %s29 = ssub.s32 %s16, %s28
    %s30 = ssub.s32 %s17, %s24
    %s31 = sor.u32 %s29, %s30
    %p32 = scmp.eq.s32.totalorder %s31, 0
    %s34 = sadd.s32 %s33, 1
    %s35 = scalar_select %p32, %s33, %s34
    %p38 = pneg %p32
    %p39 = scmp.eq.s32.totalorder %s9, 1
    %p40 = por %p38, %p39
    %p41 = scmp.ne.s32.totalorder %s33, %s36
    %p42 = scmp.eq.s32.totalorder %s9, 0
    %p43 = por %p41, %p42
    %p44 = scmp.ne.s32.totalorder %s33, %s36
    %p45 = scmp.eq.s32.totalorder %s14, 1
    %p46 = por %p44, %p45
    %p47 = scmp.ne.s32.totalorder %s36, %s37
    %p48 = scmp.eq.s32.totalorder %s14, 0
    %p49 = por %p47, %p48
    %p50 = scmp.ne.s32.totalorder %s36, %s37
    %p51 = scmp.eq.s32.totalorder %s15, 1
    %p52 = por %p50, %p51
    %p54 = scmp.ne.s32.totalorder %s37, %s53
    %p55 = scmp.eq.s32.totalorder %s15, 0
    %p56 = por %p54, %p55
    %s57 = ssub.s32 %s17, %s24
    %p58 = scmp.eq.s32.totalorder %s57, 0
    %s60 = sadd.s32 %s59, 1
    %s61 = scalar_select %p58, %s59, %s60
    %p64 = pneg %p58
    %p65 = scmp.eq.s32.totalorder %s9, 1
    %p66 = por %p64, %p65
    %p67 = scmp.ne.s32.totalorder %s59, %s62
    %p68 = scmp.eq.s32.totalorder %s9, 0
    %p69 = por %p67, %p68
    %p70 = scmp.ne.s32.totalorder %s59, %s62
    %p71 = scmp.eq.s32.totalorder %s14, 1
    %p72 = por %p70, %p71
    %p73 = scmp.ne.s32.totalorder %s62, %s63
    %p74 = scmp.eq.s32.totalorder %s14, 0
    %p75 = por %p73, %p74
    %p76 = scmp.ne.s32.totalorder %s62, %s63
    %p77 = scmp.eq.s32.totalorder %s15, 1
    %p78 = por %p76, %p77
    %p80 = scmp.ne.s32.totalorder %s63, %s79
    %p81 = scmp.eq.s32.totalorder %s15, 0
    %p82 = por %p80, %p81
    %s84 = sadd.s32 %s83, 1
    %p87 = scmp.eq.s32.totalorder %s9, 1
    %p88 = scmp.ne.s32.totalorder %s83, %s85
    %p89 = scmp.eq.s32.totalorder %s9, 0
    %p90 = por %p88, %p89
    %p91 = scmp.ne.s32.totalorder %s83, %s85
    %p92 = scmp.eq.s32.totalorder %s14, 1
    %p93 = por %p91, %p92
    %p94 = scmp.ne.s32.totalorder %s85, %s86
    %p95 = scmp.eq.s32.totalorder %s14, 0
    %p96 = por %p94, %p95
    %p97 = scmp.ne.s32.totalorder %s85, %s86
    %p98 = scmp.eq.s32.totalorder %s15, 1
    %p99 = por %p97, %p98
    %p101 = scmp.ne.s32.totalorder %s86, %s100
    %p102 = scmp.eq.s32.totalorder %s15, 0
    %p103 = por %p101, %p102
    %s104 = ssub.s32 %s16, %s28
    %s105 = ssub.s32 %s17, %s24
    %s106 = sor.u32 %s104, %s105
    %p107 = scmp.eq.s32.totalorder %s106, 0
    %s109 = sadd.s32 %s108, 1
    %s110 = scalar_select %p107, %s108, %s109
    %p113 = pneg %p107
    %p114 = scmp.eq.s32.totalorder %s9, 1
    %p115 = por %p113, %p114
    %p116 = scmp.ne.s32.totalorder %s108, %s111
    %p117 = scmp.eq.s32.totalorder %s9, 0
    %p118 = por %p116, %p117
    %p119 = scmp.ne.s32.totalorder %s108, %s111
    %p120 = scmp.eq.s32.totalorder %s14, 1
    %p121 = por %p119, %p120
    %p122 = scmp.ne.s32.totalorder %s111, %s112
    %p123 = scmp.eq.s32.totalorder %s14, 0
    %p124 = por %p122, %p123
    %p125 = scmp.ne.s32.totalorder %s111, %s112
    %p126 = scmp.eq.s32.totalorder %s15, 1
    %p127 = por %p125, %p126
    %p129 = scmp.ne.s32.totalorder %s112, %s128
    %p130 = scmp.eq.s32.totalorder %s15, 0
    %p131 = por %p129, %p130
    %p132 = scmp.le.s32.totalorder 1, %s9
    %p133 = scmp.lt.s32.totalorder %s9, 3
    %p134 = pnand %p132, %p133
    %p135 = pneg %p134
    // Predicated region
    $region9: #{tpu_custom_call.1} parent=5 // pred_check
      _
    $region10: #{tpu_custom_call.1} parent=5 // pred_check_branch
      %137 = sbr.rel (%p134) target = $region12
    $region11: #{tpu_custom_call.1} parent=5 // pred_region
      %s138 = ssub.s32 %s9, 1
      // Predicated region
      $region13: #{tpu_custom_call.1} parent=11 // pred_check
        %p139 = pneg %p75
      $region14: #{tpu_custom_call.1} parent=11 // pred_check_branch
        %141 = sbr.rel (%p139) target = $region16
      $region15: #{tpu_custom_call.1} parent=11 // pred_region
        %s142 = smul.u32 2, %s19
        %p143 = scmp.lt.s32.totalorder %s142, 1
        %s144 = scalar_select %p143, %s142, 1
        %s145 = scalar_lea.vmem %s1, %s144
        %s146 = smul.u32 2, %s19
      $region16: #{tpu_custom_call.1} parent=11 // pred_fallthru
        _
      // Predicated region
      $region17: #{tpu_custom_call.1} parent=11 // pred_check
        %p147 = pneg %p96
      $region18: #{tpu_custom_call.1} parent=11 // pred_check_branch
        %149 = sbr.rel (%p147) target = $region20
      $region19: #{tpu_custom_call.1} parent=11 // pred_region
        _
      $region20: #{tpu_custom_call.1} parent=11 // pred_fallthru
        _
    $region12: #{tpu_custom_call.1} parent=5 // pred_fallthru
      _
    %p150 = scmp.lt.s32.totalorder %s9, 2
    // Predicated region
    $region21: #{tpu_custom_call.1} parent=5 // pred_check
      %p151 = pneg %p150
    $region22: #{tpu_custom_call.1} parent=5 // pred_check_branch
      %153 = sbr.rel (%p151) target = $region24
    $region23: #{tpu_custom_call.1} parent=5 // pred_region
      // Predicated region
      $region25: #{tpu_custom_call.1} parent=23 // pred_check
        %p154 = pneg %p43
      $region26: #{tpu_custom_call.1} parent=23 // pred_check_branch
        %156 = sbr.rel (%p154) target = $region28
      $region27: #{tpu_custom_call.1} parent=23 // pred_region
        %s157 = smul.u32 2, %s17
        %p158 = scmp.lt.s32.totalorder %s16, 1
        %s159 = scalar_select %p158, %s16, 1
        %p160 = scmp.lt.s32.totalorder %s157, 1
        %s161 = scalar_select %p160, %s157, 1
        %s162 = smul.addr %s159, 6
        %s163 = sadd.s32 %s161, %s162
        %s164 = smul.addr %s163, 8
        %s165 = scalar_lea.vmem %s0, %s164
        %s166 = smul.u32 2, %s17
      $region28: #{tpu_custom_call.1} parent=23 // pred_fallthru
        _
    $region24: #{tpu_custom_call.1} parent=5 // pred_fallthru
      _
    %p167 = scmp.le.s32.totalorder 1, %s9
    %p168 = scmp.lt.s32.totalorder %s9, 3
    %p169 = pnand %p167, %p168
    %p170 = pneg %p169
    // Predicated region
    $region29: #{tpu_custom_call.1} parent=5 // pred_check
      _
    $region30: #{tpu_custom_call.1} parent=5 // pred_check_branch
      %172 = sbr.rel (%p169) target = $region32
    $region31: #{tpu_custom_call.1} parent=5 // pred_region
      %s173 = ssub.s32 %s9, 1
      %s174 = smul.u32 2, %s19
      %p175 = scmp.lt.s32.totalorder %s18, 1
      %s176 = scalar_select %p175, %s18, 1
      %p177 = scmp.lt.s32.totalorder %s174, 1
      %s178 = scalar_select %p177, %s174, 1
      %s179 = smul.addr %s176, 6
      %s180 = sadd.s32 %s178, %s179
      %s181 = smul.addr %s180, 8
      %s182 = scalar_lea.vmem %s0, %s181
      %p183 = pneg %p49
      %p184 = pneg %p46
      %s185 = smul.u32 2, %s19
      %p186 = scmp.lt.s32.totalorder %s185, 1
      %s187 = scalar_select %p186, %s185, 1
      %s188 = scalar_lea.vmem %s1, %s187
      %p189 = pneg %p75
      %p190 = pneg %p72
      %p191 = pneg %p96
      %p192 = pneg %p93
      %p193 = pneg %p124
      %p194 = pneg %p121
      %s195 = smul.u32 32, %s19
      %p196 = scmp.lt.s32.totalorder %s18, 1
      %s197 = scalar_select %p196, %s18, 1
      %p198 = scmp.lt.s32.totalorder %s195, 31
      %s199 = scalar_select %p198, %s195, 31
      %s200 = smul.addr %s197, 96
      %s201 = sadd.s32 %s199, %s200
      %s202 = smul.addr %s201, 8
      %s203 = scalar_lea.vmem %s3, %s202
      %s204 = smul.u32 2, %s19
      %p205 = scmp.lt.s32.totalorder %s18, 1
      %s206 = scalar_select %p205, %s18, 1
      %p207 = scmp.lt.s32.totalorder %s204, 1
      %s208 = scalar_select %p207, %s204, 1
      %s209 = smul.addr %s206, 6
      %s210 = sadd.s32 %s208, %s209
      %s211 = smul.addr %s210, 8
      %s212 = scalar_lea.vmem %s0, %s211
      %s213 = smul.u32 2, %s19
      %s214 = smul.u32 2, %s19
      %p215 = scmp.lt.s32.totalorder %s214, 1
      %s216 = scalar_select %p215, %s214, 1
      %s217 = scalar_lea.vmem %s1, %s216
      %s218 = smul.u32 2, %s19
      %s219 = smul.u32 32, %s19
      %p220 = scmp.lt.s32.totalorder %s18, 1
      %s221 = scalar_select %p220, %s18, 1
      %p222 = scmp.lt.s32.totalorder %s219, 31
      %s223 = scalar_select %p222, %s219, 31
      %s224 = smul.addr %s221, 96
      %s225 = sadd.s32 %s223, %s224
      %s226 = smul.addr %s225, 8
      %s227 = scalar_lea.vmem %s3, %s226
      %s228 = smul.u32 32, %s19
      %v229 = vld [vmem:[%s212] sm:$0x7f]
      %v230 = vld [vmem:[%s212 + $0x8] sm:$0x7f]
      %v231 = vld [vmem:[%s212 + $0x10] sm:$0x7f]
      %v232 = vld [vmem:[%s212 + $0x18] sm:$0x7f]
      %v233 = vld [vmem:[%s212 + $0x20] sm:$0x7f]
      %v234 = vld [vmem:[%s212 + $0x28] sm:$0x7f]
      %v235 = vxor.u32 %v229, 2147483648
      %v236 = vxor.u32 %v230, 2147483648
      %v237 = vxor.u32 %v231, 2147483648
      %v238 = vxor.u32 %v232, 2147483648
      %v239 = vxor.u32 %v233, 2147483648
      %v240 = vxor.u32 %v234, 2147483648
      %v241 = vmul.f32 %v235, 1.442695
      %v242 = vpow.pop %v241
      %v243 = vmul.f32 %v236, 1.442695
      %v244 = vpow.pop %v243
      %v245 = vmul.f32 %v237, 1.442695
      %v246 = vpow.pop %v245
      %v247 = vmul.f32 %v238, 1.442695
      %v248 = vpow.pop %v247
      %v249 = vmul.f32 %v239, 1.442695
      %v250 = vpow.pop %v249
      %v251 = vmul.f32 %v240, 1.442695
      %v252 = vpow.pop %v251
      %v253 = vadd.f32 %v242, 1.0
      %v254 = vadd.f32 %v244, 1.0
      %v255 = vadd.f32 %v246, 1.0
      %v256 = vadd.f32 %v248, 1.0
      %v257 = vadd.f32 %v250, 1.0
      %v258 = vadd.f32 %v252, 1.0
      %v259 = vrcp.pop %v253
      %v260 = vmul.f32 %v253, %v259
      %v261 = vsub.f32 1.0, %v260
      %v262 = vmul.f32 %v259, %v261
      %v263 = vadd.f32 %v259, %v262
      %vm264 = vweird.f32 %v253
      %vm265 = vweird.f32 %v259
      %vm266 = vmor %vm264, %vm265
      %v267 = vsel %vm266, %v259, %v263
      %v268 = vand.u32 2147483647, %v253
      %vm269 = vcmp.eq.f32.partialorder %v268, 8.507059e+37
      %v270 = vand.u32 %v253, 2147483648
      %v271 = vor.u32 1.1754944e-38, %v270
      %v272 = vsel %vm269, %v271, %v267
      %v273 = vmul.f32 1.0, %v272
      %v274 = vrcp.pop %v254
      %v275 = vmul.f32 %v254, %v274
      %v276 = vsub.f32 1.0, %v275
      %v277 = vmul.f32 %v274, %v276
      %v278 = vadd.f32 %v274, %v277
      %vm279 = vweird.f32 %v254
      %vm280 = vweird.f32 %v274
      %vm281 = vmor %vm279, %vm280
      %v282 = vsel %vm281, %v274, %v278
      %v283 = vand.u32 2147483647, %v254
      %vm284 = vcmp.eq.f32.partialorder %v283, 8.507059e+37
      %v285 = vand.u32 %v254, 2147483648
      %v286 = vor.u32 1.1754944e-38, %v285
      %v287 = vsel %vm284, %v286, %v282
      %v288 = vmul.f32 1.0, %v287
      %v289 = vrcp.pop %v255
      %v290 = vmul.f32 %v255, %v289
      %v291 = vsub.f32 1.0, %v290
      %v292 = vmul.f32 %v289, %v291
      %v293 = vadd.f32 %v289, %v292
      %vm294 = vweird.f32 %v255
      %vm295 = vweird.f32 %v289
      %vm296 = vmor %vm294, %vm295
      %v297 = vsel %vm296, %v289, %v293
      %v298 = vand.u32 2147483647, %v255
      %vm299 = vcmp.eq.f32.partialorder %v298, 8.507059e+37
      %v300 = vand.u32 %v255, 2147483648
      %v301 = vor.u32 1.1754944e-38, %v300
      %v302 = vsel %vm299, %v301, %v297
      %v303 = vmul.f32 1.0, %v302
      %v304 = vrcp.pop %v256
      %v305 = vmul.f32 %v256, %v304
      %v306 = vsub.f32 1.0, %v305
      %v307 = vmul.f32 %v304, %v306
      %v308 = vadd.f32 %v304, %v307
      %vm309 = vweird.f32 %v256
      %vm310 = vweird.f32 %v304
      %vm311 = vmor %vm309, %vm310
      %v312 = vsel %vm311, %v304, %v308
      %v313 = vand.u32 2147483647, %v256
      %vm314 = vcmp.eq.f32.partialorder %v313, 8.507059e+37
      %v315 = vand.u32 %v256, 2147483648
      %v316 = vor.u32 1.1754944e-38, %v315
      %v317 = vsel %vm314, %v316, %v312
      %v318 = vmul.f32 1.0, %v317
      %v319 = vrcp.pop %v257
      %v320 = vmul.f32 %v257, %v319
      %v321 = vsub.f32 1.0, %v320
      %v322 = vmul.f32 %v319, %v321
      %v323 = vadd.f32 %v319, %v322
      %vm324 = vweird.f32 %v257
      %vm325 = vweird.f32 %v319
      %vm326 = vmor %vm324, %vm325
      %v327 = vsel %vm326, %v319, %v323
      %v328 = vand.u32 2147483647, %v257
      %vm329 = vcmp.eq.f32.partialorder %v328, 8.507059e+37
      %v330 = vand.u32 %v257, 2147483648
      %v331 = vor.u32 1.1754944e-38, %v330
      %v332 = vsel %vm329, %v331, %v327
      %v333 = vmul.f32 1.0, %v332
      %v334 = vrcp.pop %v258
      %v335 = vmul.f32 %v258, %v334
      %v336 = vsub.f32 1.0, %v335
      %v337 = vmul.f32 %v334, %v336
      %v338 = vadd.f32 %v334, %v337
      %vm339 = vweird.f32 %v258
      %vm340 = vweird.f32 %v334
      %vm341 = vmor %vm339, %vm340
      %v342 = vsel %vm341, %v334, %v338
      %v343 = vand.u32 2147483647, %v258
      %vm344 = vcmp.eq.f32.partialorder %v343, 8.507059e+37
      %v345 = vand.u32 %v258, 2147483648
      %v346 = vor.u32 1.1754944e-38, %v345
      %v347 = vsel %vm344, %v346, %v342
      %v348 = vmul.f32 1.0, %v347
      %v349 = vlaneseq
      %v350 = vshrl.u32 %v349, 7
      %vm351 = vcmp.eq.s32.totalorder %v350, 0
      %v352 = vld [vmem:[%s217] sm:$0x3]
      %s353 = scalar_lea.vmem %s217, 2
      %v354 = vld [vmem:[%s353] sm:$0x3]
      %v356 = vperm.slane %v352, 0
      %v357 = vperm.slane %v352, 1
      %v361 = vperm.slane %v354, 0
      %v362 = vperm.slane %v354, 1
      %v365 = vsel %vm351, %v356, %v361
      %v366 = vsel %vm351, %v357, %v362
      %vm367 = vcmp.lt.s32.totalorder %v350, 2
      %v368 = vmul.f32 %v273, 26.0
      %v369 = vmul.f32 %v288, 26.0
      %v370 = vmul.f32 %v303, 26.0
      %v371 = vmul.f32 %v318, 26.0
      %v372 = vmul.f32 %v333, 26.0
      %v373 = vmul.f32 %v348, 26.0
      %v374 = vadd.f32 %v368, %v365
      %v375 = vadd.f32 %v369, %v366
      %v376 = vadd.f32 %v370, %v365
      %v377 = vadd.f32 %v371, %v366
      %v378 = vadd.f32 %v372, %v365
      %v379 = vadd.f32 %v373, %v366
      %v380 = vsel %vm367, %v374, %v273
      %v381 = vsel %vm367, %v375, %v288
      %v382 = vsel %vm367, %v376, %v303
      %v383 = vsel %vm367, %v377, %v318
      %v384 = vsel %vm367, %v378, %v333
      %v385 = vsel %vm367, %v379, %v348
      %v386 = vmul.f32 %v229, 1.442695
      %v387 = vpow.pop %v386
      %v388 = vmul.f32 %v230, 1.442695
      %v389 = vpow.pop %v388
      %v390 = vmul.f32 %v231, 1.442695
      %v391 = vpow.pop %v390
      %v392 = vmul.f32 %v232, 1.442695
      %v393 = vpow.pop %v392
      %v394 = vmul.f32 %v233, 1.442695
      %v395 = vpow.pop %v394
      %v396 = vmul.f32 %v234, 1.442695
      %v397 = vpow.pop %v396
      %v398 = vld [vmem:[%s2] sm:$0x3]
      %v399 = vld [vmem:[%s2 + $0x2] sm:$0x3]
      %v400 = vld [vmem:[%s2 + $0x4] sm:$0x3]
      %402 = vset.pattern.permute.xlu0 0
      %403 = vperm.xlu0 %402, %v398
      %v404 = vpop.permute.xlu0 %403
      %406 = vset.pattern.permute.xlu0 0
      %407 = vperm.xlu0 %406, %v399
      %v408 = vpop.permute.xlu0 %407
      %410 = vset.pattern.permute.xlu0 0
      %411 = vperm.xlu0 %410, %v400
      %v412 = vpop.permute.xlu0 %411
      %v413 = vrot.slane %v404, 6
      %v414 = vrot.slane %v408, 6
      %v415 = vrot.slane %v412, 6
      %v419 = vmul.f32 %v387, %v413
      %v420 = vmul.f32 %v389, %v413
      %v421 = vmul.f32 %v391, %v414
      %v422 = vmul.f32 %v393, %v414
      %v423 = vmul.f32 %v395, %v415
      %v424 = vmul.f32 %v397, %v415
      %425 = vxpose.xlu0.b32.start [1/16] %v380, 128
      %426 = vxpose.xlu0.b32.cont [2/16] 0.0, 128
      %427 = vxpose.xlu0.b32.cont [3/16] 0.0, 128
      %428 = vxpose.xlu0.b32.cont [4/16] 0.0, 128
      %429 = vxpose.xlu0.b32.cont [5/16] 0.0, 128
      %430 = vxpose.xlu0.b32.cont [6/16] 0.0, 128
      %431 = vxpose.xlu0.b32.cont [7/16] 0.0, 128
      %432 = vxpose.xlu0.b32.cont [8/16] 0.0, 128
      %433 = vxpose.xlu0.b32.cont [9/16] 0.0, 128
      %434 = vxpose.xlu0.b32.cont [10/16] 0.0, 128
      %435 = vxpose.xlu0.b32.cont [11/16] 0.0, 128
      %436 = vxpose.xlu0.b32.cont [12/16] 0.0, 128
      %437 = vxpose.xlu0.b32.cont [13/16] 0.0, 128
      %438 = vxpose.xlu0.b32.cont [14/16] 0.0, 128
      %439 = vxpose.xlu0.b32.cont [15/16] 0.0, 128
      %440 = vxpose.xlu0.b32.end [16/16] 0.0, 128
      %v441 = vpop.trf.xlu0
      %v442 = vpop.trf.xlu0
      %v443 = vpop.trf.xlu0
      %v444 = vpop.trf.xlu0
      %v445 = vpop.trf.xlu0
      %v446 = vpop.trf.xlu0
      %v447 = vpop.trf.xlu0
      %v448 = vpop.trf.xlu0
      %v449 = vpop.trf.xlu0
      %v450 = vpop.trf.xlu0
      %v451 = vpop.trf.xlu0
      %v452 = vpop.trf.xlu0
      %v453 = vpop.trf.xlu0
      %v454 = vpop.trf.xlu0
      %v455 = vpop.trf.xlu0
      %v456 = vpop.trf.xlu0
      %457 = vxpose.xlu0.b32.start [1/16] %v381, 128
      %458 = vxpose.xlu0.b32.cont [2/16] 0.0, 128
      %459 = vxpose.xlu0.b32.cont [3/16] 0.0, 128
      %460 = vxpose.xlu0.b32.cont [4/16] 0.0, 128
      %461 = vxpose.xlu0.b32.cont [5/16] 0.0, 128
      %462 = vxpose.xlu0.b32.cont [6/16] 0.0, 128
      %463 = vxpose.xlu0.b32.cont [7/16] 0.0, 128
      %464 = vxpose.xlu0.b32.cont [8/16] 0.0, 128
      %465 = vxpose.xlu0.b32.cont [9/16] 0.0, 128
      %466 = vxpose.xlu0.b32.cont [10/16] 0.0, 128
      %467 = vxpose.xlu0.b32.cont [11/16] 0.0, 128
      %468 = vxpose.xlu0.b32.cont [12/16] 0.0, 128
      %469 = vxpose.xlu0.b32.cont [13/16] 0.0, 128
      %470 = vxpose.xlu0.b32.cont [14/16] 0.0, 128
      %471 = vxpose.xlu0.b32.cont [15/16] 0.0, 128
      %472 = vxpose.xlu0.b32.end [16/16] 0.0, 128
      %v473 = vpop.trf.xlu0
      %v474 = vpop.trf.xlu0
      %v475 = vpop.trf.xlu0
      %v476 = vpop.trf.xlu0
      %v477 = vpop.trf.xlu0
      %v478 = vpop.trf.xlu0
      %v479 = vpop.trf.xlu0
      %v480 = vpop.trf.xlu0
      %v481 = vpop.trf.xlu0
      %v482 = vpop.trf.xlu0
      %v483 = vpop.trf.xlu0
      %v484 = vpop.trf.xlu0
      %v485 = vpop.trf.xlu0
      %v486 = vpop.trf.xlu0
      %v487 = vpop.trf.xlu0
      %v488 = vpop.trf.xlu0
      %vm489 = vcmask 56320
      %490 = vst.msk [vmem:[%s227] sm:$0xff] %vm489, %v441
      %491 = vst.msk [vmem:[%s227 + $0x8] sm:$0xff] %vm489, %v442
      %492 = vst.msk [vmem:[%s227 + $0x10] sm:$0xff] %vm489, %v443
      %493 = vst.msk [vmem:[%s227 + $0x18] sm:$0xff] %vm489, %v444
      %494 = vst.msk [vmem:[%s227 + $0x20] sm:$0xff] %vm489, %v445
      %495 = vst.msk [vmem:[%s227 + $0x28] sm:$0xff] %vm489, %v446
      %496 = vst.msk [vmem:[%s227 + $0x30] sm:$0xff] %vm489, %v447
      %497 = vst.msk [vmem:[%s227 + $0x38] sm:$0xff] %vm489, %v448
      %498 = vst.msk [vmem:[%s227 + $0x40] sm:$0xff] %vm489, %v449
      %499 = vst.msk [vmem:[%s227 + $0x48] sm:$0xff] %vm489, %v450
      %500 = vst.msk [vmem:[%s227 + $0x50] sm:$0xff] %vm489, %v451
      %501 = vst.msk [vmem:[%s227 + $0x58] sm:$0xff] %vm489, %v452
      %502 = vst.msk [vmem:[%s227 + $0x60] sm:$0xff] %vm489, %v453
      %503 = vst.msk [vmem:[%s227 + $0x68] sm:$0xff] %vm489, %v454
      %504 = vst.msk [vmem:[%s227 + $0x70] sm:$0xff] %vm489, %v455
      %505 = vst.msk [vmem:[%s227 + $0x78] sm:$0xff] %vm489, %v456
      %506 = vst.msk [vmem:[%s227 + $0x80] sm:$0xff] %vm489, %v473
      %507 = vst.msk [vmem:[%s227 + $0x88] sm:$0xff] %vm489, %v474
      %508 = vst.msk [vmem:[%s227 + $0x90] sm:$0xff] %vm489, %v475
      %509 = vst.msk [vmem:[%s227 + $0x98] sm:$0xff] %vm489, %v476
      %510 = vst.msk [vmem:[%s227 + $0xa0] sm:$0xff] %vm489, %v477
      %511 = vst.msk [vmem:[%s227 + $0xa8] sm:$0xff] %vm489, %v478
      %512 = vst.msk [vmem:[%s227 + $0xb0] sm:$0xff] %vm489, %v479
      %513 = vst.msk [vmem:[%s227 + $0xb8] sm:$0xff] %vm489, %v480
      %514 = vst.msk [vmem:[%s227 + $0xc0] sm:$0xff] %vm489, %v481
      %515 = vst.msk [vmem:[%s227 + $0xc8] sm:$0xff] %vm489, %v482
      %516 = vst.msk [vmem:[%s227 + $0xd0] sm:$0xff] %vm489, %v483
      %517 = vst.msk [vmem:[%s227 + $0xd8] sm:$0xff] %vm489, %v484
      %518 = vst.msk [vmem:[%s227 + $0xe0] sm:$0xff] %vm489, %v485
      %519 = vst.msk [vmem:[%s227 + $0xe8] sm:$0xff] %vm489, %v486
      %520 = vst.msk [vmem:[%s227 + $0xf0] sm:$0xff] %vm489, %v487
      %521 = vst.msk [vmem:[%s227 + $0xf8] sm:$0xff] %vm489, %v488
      %v524 = vrot.slane %v419, 2
      %v525 = vrot.slane %v420, 2
      %528 = vxpose.xlu0.b32.start [1/16] %v524, 128
      %529 = vxpose.xlu0.b32.cont [2/16] 0.0, 128
      %530 = vxpose.xlu0.b32.cont [3/16] 0.0, 128
      %531 = vxpose.xlu0.b32.cont [4/16] 0.0, 128
      %532 = vxpose.xlu0.b32.cont [5/16] 0.0, 128
      %533 = vxpose.xlu0.b32.cont [6/16] 0.0, 128
      %534 = vxpose.xlu0.b32.cont [7/16] 0.0, 128
      %535 = vxpose.xlu0.b32.cont [8/16] 0.0, 128
      %536 = vxpose.xlu0.b32.cont [9/16] 0.0, 128
      %537 = vxpose.xlu0.b32.cont [10/16] 0.0, 128
      %538 = vxpose.xlu0.b32.cont [11/16] 0.0, 128
      %539 = vxpose.xlu0.b32.cont [12/16] 0.0, 128
      %540 = vxpose.xlu0.b32.cont [13/16] 0.0, 128
      %541 = vxpose.xlu0.b32.cont [14/16] 0.0, 128
      %542 = vxpose.xlu0.b32.cont [15/16] 0.0, 128
      %543 = vxpose.xlu0.b32.end [16/16] 0.0, 128
      %v544 = vpop.trf.xlu0
      %v545 = vpop.trf.xlu0
      %v546 = vpop.trf.xlu0
      %v547 = vpop.trf.xlu0
      %v548 = vpop.trf.xlu0
      %v549 = vpop.trf.xlu0
      %v550 = vpop.trf.xlu0
      %v551 = vpop.trf.xlu0
      %v552 = vpop.trf.xlu0
      %v553 = vpop.trf.xlu0
      %v554 = vpop.trf.xlu0
      %v555 = vpop.trf.xlu0
      %v556 = vpop.trf.xlu0
      %v557 = vpop.trf.xlu0
      %v558 = vpop.trf.xlu0
      %v559 = vpop.trf.xlu0
      %560 = vxpose.xlu0.b32.start [1/16] %v525, 128
      %561 = vxpose.xlu0.b32.cont [2/16] 0.0, 128
      %562 = vxpose.xlu0.b32.cont [3/16] 0.0, 128
      %563 = vxpose.xlu0.b32.cont [4/16] 0.0, 128
      %564 = vxpose.xlu0.b32.cont [5/16] 0.0, 128
      %565 = vxpose.xlu0.b32.cont [6/16] 0.0, 128
      %566 = vxpose.xlu0.b32.cont [7/16] 0.0, 128
      %567 = vxpose.xlu0.b32.cont [8/16] 0.0, 128
      %568 = vxpose.xlu0.b32.cont [9/16] 0.0, 128
      %569 = vxpose.xlu0.b32.cont [10/16] 0.0, 128
      %570 = vxpose.xlu0.b32.cont [11/16] 0.0, 128
      %571 = vxpose.xlu0.b32.cont [12/16] 0.0, 128
      %572 = vxpose.xlu0.b32.cont [13/16] 0.0, 128
      %573 = vxpose.xlu0.b32.cont [14/16] 0.0, 128
      %574 = vxpose.xlu0.b32.cont [15/16] 0.0, 128
      %575 = vxpose.xlu0.b32.end [16/16] 0.0, 128
      %v576 = vpop.trf.xlu0
      %v577 = vpop.trf.xlu0
      %v578 = vpop.trf.xlu0
      %v579 = vpop.trf.xlu0
      %v580 = vpop.trf.xlu0
      %v581 = vpop.trf.xlu0
      %v582 = vpop.trf.xlu0
      %v583 = vpop.trf.xlu0
      %v584 = vpop.trf.xlu0
      %v585 = vpop.trf.xlu0
      %v586 = vpop.trf.xlu0
      %v587 = vpop.trf.xlu0
      %v588 = vpop.trf.xlu0
      %v589 = vpop.trf.xlu0
      %v590 = vpop.trf.xlu0
      %v591 = vpop.trf.xlu0
      %624 = vrot.lane.b32.xlu0 %v544, 2
      %v625 = vpop.permute.xlu0 %624
      %626 = vrot.lane.b32.xlu0 %v545, 2
      %v627 = vpop.permute.xlu0 %626
      %628 = vrot.lane.b32.xlu0 %v546, 2
      %v629 = vpop.permute.xlu0 %628
      %630 = vrot.lane.b32.xlu0 %v547, 2
      %v631 = vpop.permute.xlu0 %630
      %632 = vrot.lane.b32.xlu0 %v548, 2
      %v633 = vpop.permute.xlu0 %632
      %634 = vrot.lane.b32.xlu0 %v549, 2
      %v635 = vpop.permute.xlu0 %634
      %636 = vrot.lane.b32.xlu0 %v550, 2
      %v637 = vpop.permute.xlu0 %636
      %638 = vrot.lane.b32.xlu0 %v551, 2
      %v639 = vpop.permute.xlu0 %638
      %640 = vrot.lane.b32.xlu0 %v552, 2
      %v641 = vpop.permute.xlu0 %640
      %642 = vrot.lane.b32.xlu0 %v553, 2
      %v643 = vpop.permute.xlu0 %642
      %644 = vrot.lane.b32.xlu0 %v554, 2
      %v645 = vpop.permute.xlu0 %644
      %646 = vrot.lane.b32.xlu0 %v555, 2
      %v647 = vpop.permute.xlu0 %646
      %648 = vrot.lane.b32.xlu0 %v556, 2
      %v649 = vpop.permute.xlu0 %648
      %650 = vrot.lane.b32.xlu0 %v557, 2
      %v651 = vpop.permute.xlu0 %650
      %652 = vrot.lane.b32.xlu0 %v558, 2
      %v653 = vpop.permute.xlu0 %652
      %654 = vrot.lane.b32.xlu0 %v559, 2
      %v655 = vpop.permute.xlu0 %654
      %656 = vrot.lane.b32.xlu0 %v576, 2
      %v657 = vpop.permute.xlu0 %656
      %658 = vrot.lane.b32.xlu0 %v577, 2
      %v659 = vpop.permute.xlu0 %658
      %660 = vrot.lane.b32.xlu0 %v578, 2
      %v661 = vpop.permute.xlu0 %660
      %662 = vrot.lane.b32.xlu0 %v579, 2
      %v663 = vpop.permute.xlu0 %662
      %664 = vrot.lane.b32.xlu0 %v580, 2
      %v665 = vpop.permute.xlu0 %664
      %666 = vrot.lane.b32.xlu0 %v581, 2
      %v667 = vpop.permute.xlu0 %666
      %668 = vrot.lane.b32.xlu0 %v582, 2
      %v669 = vpop.permute.xlu0 %668
      %670 = vrot.lane.b32.xlu0 %v583, 2
      %v671 = vpop.permute.xlu0 %670
      %672 = vrot.lane.b32.xlu0 %v584, 2
      %v673 = vpop.permute.xlu0 %672
      %674 = vrot.lane.b32.xlu0 %v585, 2
      %v675 = vpop.permute.xlu0 %674
      %676 = vrot.lane.b32.xlu0 %v586, 2
      %v677 = vpop.permute.xlu0 %676
      %678 = vrot.lane.b32.xlu0 %v587, 2
      %v679 = vpop.permute.xlu0 %678
      %680 = vrot.lane.b32.xlu0 %v588, 2
      %v681 = vpop.permute.xlu0 %680
      %682 = vrot.lane.b32.xlu0 %v589, 2
      %v683 = vpop.permute.xlu0 %682
      %684 = vrot.lane.b32.xlu0 %v590, 2
      %v685 = vpop.permute.xlu0 %684
      %686 = vrot.lane.b32.xlu0 %v591, 2
      %v687 = vpop.permute.xlu0 %686
      %vm720 = vcmask 31760
      %721 = vst.msk [vmem:[%s227] sm:$0xff] %vm720, %v625
      %722 = vst.msk [vmem:[%s227 + $0x8] sm:$0xff] %vm720, %v627
      %723 = vst.msk [vmem:[%s227 + $0x10] sm:$0xff] %vm720, %v629
      %724 = vst.msk [vmem:[%s227 + $0x18] sm:$0xff] %vm720, %v631
      %725 = vst.msk [vmem:[%s227 + $0x20] sm:$0xff] %vm720, %v633
      %726 = vst.msk [vmem:[%s227 + $0x28] sm:$0xff] %vm720, %v635
      %727 = vst.msk [vmem:[%s227 + $0x30] sm:$0xff] %vm720, %v637
      %728 = vst.msk [vmem:[%s227 + $0x38] sm:$0xff] %vm720, %v639
      %729 = vst.msk [vmem:[%s227 + $0x40] sm:$0xff] %vm720, %v641
      %730 = vst.msk [vmem:[%s227 + $0x48] sm:$0xff] %vm720, %v643
      %731 = vst.msk [vmem:[%s227 + $0x50] sm:$0xff] %vm720, %v645
      %732 = vst.msk [vmem:[%s227 + $0x58] sm:$0xff] %vm720, %v647
      %733 = vst.msk [vmem:[%s227 + $0x60] sm:$0xff] %vm720, %v649
      %734 = vst.msk [vmem:[%s227 + $0x68] sm:$0xff] %vm720, %v651
      %735 = vst.msk [vmem:[%s227 + $0x70] sm:$0xff] %vm720, %v653
      %736 = vst.msk [vmem:[%s227 + $0x78] sm:$0xff] %vm720, %v655
      %737 = vst.msk [vmem:[%s227 + $0x80] sm:$0xff] %vm720, %v657
      %738 = vst.msk [vmem:[%s227 + $0x88] sm:$0xff] %vm720, %v659
      %739 = vst.msk [vmem:[%s227 + $0x90] sm:$0xff] %vm720, %v661
      %740 = vst.msk [vmem:[%s227 + $0x98] sm:$0xff] %vm720, %v663
      %741 = vst.msk [vmem:[%s227 + $0xa0] sm:$0xff] %vm720, %v665
      %742 = vst.msk [vmem:[%s227 + $0xa8] sm:$0xff] %vm720, %v667
      %743 = vst.msk [vmem:[%s227 + $0xb0] sm:$0xff] %vm720, %v669
      %744 = vst.msk [vmem:[%s227 + $0xb8] sm:$0xff] %vm720, %v671
      %745 = vst.msk [vmem:[%s227 + $0xc0] sm:$0xff] %vm720, %v673
      %746 = vst.msk [vmem:[%s227 + $0xc8] sm:$0xff] %vm720, %v675
      %747 = vst.msk [vmem:[%s227 + $0xd0] sm:$0xff] %vm720, %v677
      %748 = vst.msk [vmem:[%s227 + $0xd8] sm:$0xff] %vm720, %v679
      %749 = vst.msk [vmem:[%s227 + $0xe0] sm:$0xff] %vm720, %v681
      %750 = vst.msk [vmem:[%s227 + $0xe8] sm:$0xff] %vm720, %v683
      %751 = vst.msk [vmem:[%s227 + $0xf0] sm:$0xff] %vm720, %v685
      %752 = vst.msk [vmem:[%s227 + $0xf8] sm:$0xff] %vm720, %v687
      %753 = vxpose.xlu0.b32.start [1/16] %v382, 128
      %754 = vxpose.xlu0.b32.cont [2/16] 0.0, 128
      %755 = vxpose.xlu0.b32.cont [3/16] 0.0, 128
      %756 = vxpose.xlu0.b32.cont [4/16] 0.0, 128
      %757 = vxpose.xlu0.b32.cont [5/16] 0.0, 128
      %758 = vxpose.xlu0.b32.cont [6/16] 0.0, 128
      %759 = vxpose.xlu0.b32.cont [7/16] 0.0, 128
      %760 = vxpose.xlu0.b32.cont [8/16] 0.0, 128
      %761 = vxpose.xlu0.b32.cont [9/16] 0.0, 128
      %762 = vxpose.xlu0.b32.cont [10/16] 0.0, 128
      %763 = vxpose.xlu0.b32.cont [11/16] 0.0, 128
      %764 = vxpose.xlu0.b32.cont [12/16] 0.0, 128
      %765 = vxpose.xlu0.b32.cont [13/16] 0.0, 128
      %766 = vxpose.xlu0.b32.cont [14/16] 0.0, 128
      %767 = vxpose.xlu0.b32.cont [15/16] 0.0, 128
      %768 = vxpose.xlu0.b32.end [16/16] 0.0, 128
      %v769 = vpop.trf.xlu0
      %v770 = vpop.trf.xlu0
      %v771 = vpop.trf.xlu0
      %v772 = vpop.trf.xlu0
      %v773 = vpop.trf.xlu0
      %v774 = vpop.trf.xlu0
      %v775 = vpop.trf.xlu0
      %v776 = vpop.trf.xlu0
      %v777 = vpop.trf.xlu0
      %v778 = vpop.trf.xlu0
      %v779 = vpop.trf.xlu0
      %v780 = vpop.trf.xlu0
      %v781 = vpop.trf.xlu0
      %v782 = vpop.trf.xlu0
      %v783 = vpop.trf.xlu0
      %v784 = vpop.trf.xlu0
      %785 = vxpose.xlu0.b32.start [1/16] %v383, 128
      %786 = vxpose.xlu0.b32.cont [2/16] 0.0, 128
      %787 = vxpose.xlu0.b32.cont [3/16] 0.0, 128
      %788 = vxpose.xlu0.b32.cont [4/16] 0.0, 128
      %789 = vxpose.xlu0.b32.cont [5/16] 0.0, 128
      %790 = vxpose.xlu0.b32.cont [6/16] 0.0, 128
      %791 = vxpose.xlu0.b32.cont [7/16] 0.0, 128
      %792 = vxpose.xlu0.b32.cont [8/16] 0.0, 128
      %793 = vxpose.xlu0.b32.cont [9/16] 0.0, 128
      %794 = vxpose.xlu0.b32.cont [10/16] 0.0, 128
      %795 = vxpose.xlu0.b32.cont [11/16] 0.0, 128
      %796 = vxpose.xlu0.b32.cont [12/16] 0.0, 128
      %797 = vxpose.xlu0.b32.cont [13/16] 0.0, 128
      %798 = vxpose.xlu0.b32.cont [14/16] 0.0, 128
      %799 = vxpose.xlu0.b32.cont [15/16] 0.0, 128
      %800 = vxpose.xlu0.b32.end [16/16] 0.0, 128
      %v801 = vpop.trf.xlu0
      %v802 = vpop.trf.xlu0
      %v803 = vpop.trf.xlu0
      %v804 = vpop.trf.xlu0
      %v805 = vpop.trf.xlu0
      %v806 = vpop.trf.xlu0
      %v807 = vpop.trf.xlu0
      %v808 = vpop.trf.xlu0
      %v809 = vpop.trf.xlu0
      %v810 = vpop.trf.xlu0
      %v811 = vpop.trf.xlu0
      %v812 = vpop.trf.xlu0
      %v813 = vpop.trf.xlu0
      %v814 = vpop.trf.xlu0
      %v815 = vpop.trf.xlu0
      %v816 = vpop.trf.xlu0
      %s817 = scalar_lea.vmem %s227, 256
      %818 = vst.msk [vmem:[%s817] sm:$0xff] %vm489, %v769
      %819 = vst.msk [vmem:[%s817 + $0x8] sm:$0xff] %vm489, %v770
      %820 = vst.msk [vmem:[%s817 + $0x10] sm:$0xff] %vm489, %v771
      %821 = vst.msk [vmem:[%s817 + $0x18] sm:$0xff] %vm489, %v772
      %822 = vst.msk [vmem:[%s817 + $0x20] sm:$0xff] %vm489, %v773
      %823 = vst.msk [vmem:[%s817 + $0x28] sm:$0xff] %vm489, %v774
      %824 = vst.msk [vmem:[%s817 + $0x30] sm:$0xff] %vm489, %v775
      %825 = vst.msk [vmem:[%s817 + $0x38] sm:$0xff] %vm489, %v776
      %826 = vst.msk [vmem:[%s817 + $0x40] sm:$0xff] %vm489, %v777
      %827 = vst.msk [vmem:[%s817 + $0x48] sm:$0xff] %vm489, %v778
      %828 = vst.msk [vmem:[%s817 + $0x50] sm:$0xff] %vm489, %v779
      %829 = vst.msk [vmem:[%s817 + $0x58] sm:$0xff] %vm489, %v780
      %830 = vst.msk [vmem:[%s817 + $0x60] sm:$0xff] %vm489, %v781
      %831 = vst.msk [vmem:[%s817 + $0x68] sm:$0xff] %vm489, %v782
      %832 = vst.msk [vmem:[%s817 + $0x70] sm:$0xff] %vm489, %v783
      %833 = vst.msk [vmem:[%s817 + $0x78] sm:$0xff] %vm489, %v784
      %834 = vst.msk [vmem:[%s817 + $0x80] sm:$0xff] %vm489, %v801
      %835 = vst.msk [vmem:[%s817 + $0x88] sm:$0xff] %vm489, %v802
      %836 = vst.msk [vmem:[%s817 + $0x90] sm:$0xff] %vm489, %v803
      %837 = vst.msk [vmem:[%s817 + $0x98] sm:$0xff] %vm489, %v804
      %838 = vst.msk [vmem:[%s817 + $0xa0] sm:$0xff] %vm489, %v805
      %839 = vst.msk [vmem:[%s817 + $0xa8] sm:$0xff] %vm489, %v806
      %840 = vst.msk [vmem:[%s817 + $0xb0] sm:$0xff] %vm489, %v807
      %841 = vst.msk [vmem:[%s817 + $0xb8] sm:$0xff] %vm489, %v808
      %842 = vst.msk [vmem:[%s817 + $0xc0] sm:$0xff] %vm489, %v809
      %843 = vst.msk [vmem:[%s817 + $0xc8] sm:$0xff] %vm489, %v810
      %844 = vst.msk [vmem:[%s817 + $0xd0] sm:$0xff] %vm489, %v811
      %845 = vst.msk [vmem:[%s817 + $0xd8] sm:$0xff] %vm489, %v812
      %846 = vst.msk [vmem:[%s817 + $0xe0] sm:$0xff] %vm489, %v813
      %847 = vst.msk [vmem:[%s817 + $0xe8] sm:$0xff] %vm489, %v814
      %848 = vst.msk [vmem:[%s817 + $0xf0] sm:$0xff] %vm489, %v815
      %849 = vst.msk [vmem:[%s817 + $0xf8] sm:$0xff] %vm489, %v816
      %v852 = vrot.slane %v421, 2
      %v853 = vrot.slane %v422, 2
      %856 = vxpose.xlu0.b32.start [1/16] %v852, 128
      %857 = vxpose.xlu0.b32.cont [2/16] 0.0, 128
      %858 = vxpose.xlu0.b32.cont [3/16] 0.0, 128
      %859 = vxpose.xlu0.b32.cont [4/16] 0.0, 128
      %860 = vxpose.xlu0.b32.cont [5/16] 0.0, 128
      %861 = vxpose.xlu0.b32.cont [6/16] 0.0, 128
      %862 = vxpose.xlu0.b32.cont [7/16] 0.0, 128
      %863 = vxpose.xlu0.b32.cont [8/16] 0.0, 128
      %864 = vxpose.xlu0.b32.cont [9/16] 0.0, 128
      %865 = vxpose.xlu0.b32.cont [10/16] 0.0, 128
      %866 = vxpose.xlu0.b32.cont [11/16] 0.0, 128
      %867 = vxpose.xlu0.b32.cont [12/16] 0.0, 128
      %868 = vxpose.xlu0.b32.cont [13/16] 0.0, 128
      %869 = vxpose.xlu0.b32.cont [14/16] 0.0, 128
      %870 = vxpose.xlu0.b32.cont [15/16] 0.0, 128
      %871 = vxpose.xlu0.b32.end [16/16] 0.0, 128
      %v872 = vpop.trf.xlu0
      %v873 = vpop.trf.xlu0
      %v874 = vpop.trf.xlu0
      %v875 = vpop.trf.xlu0
      %v876 = vpop.trf.xlu0
      %v877 = vpop.trf.xlu0
      %v878 = vpop.trf.xlu0
      %v879 = vpop.trf.xlu0
      %v880 = vpop.trf.xlu0
      %v881 = vpop.trf.xlu0
      %v882 = vpop.trf.xlu0
      %v883 = vpop.trf.xlu0
      %v884 = vpop.trf.xlu0
      %v885 = vpop.trf.xlu0
      %v886 = vpop.trf.xlu0
      %v887 = vpop.trf.xlu0
      %888 = vxpose.xlu0.b32.start [1/16] %v853, 128
      %889 = vxpose.xlu0.b32.cont [2/16] 0.0, 128
      %890 = vxpose.xlu0.b32.cont [3/16] 0.0, 128
      %891 = vxpose.xlu0.b32.cont [4/16] 0.0, 128
      %892 = vxpose.xlu0.b32.cont [5/16] 0.0, 128
      %893 = vxpose.xlu0.b32.cont [6/16] 0.0, 128
      %894 = vxpose.xlu0.b32.cont [7/16] 0.0, 128
      %895 = vxpose.xlu0.b32.cont [8/16] 0.0, 128
      %896 = vxpose.xlu0.b32.cont [9/16] 0.0, 128
      %897 = vxpose.xlu0.b32.cont [10/16] 0.0, 128
      %898 = vxpose.xlu0.b32.cont [11/16] 0.0, 128
      %899 = vxpose.xlu0.b32.cont [12/16] 0.0, 128
      %900 = vxpose.xlu0.b32.cont [13/16] 0.0, 128
      %901 = vxpose.xlu0.b32.cont [14/16] 0.0, 128
      %902 = vxpose.xlu0.b32.cont [15/16] 0.0, 128
      %903 = vxpose.xlu0.b32.end [16/16] 0.0, 128
      %v904 = vpop.trf.xlu0
      %v905 = vpop.trf.xlu0
      %v906 = vpop.trf.xlu0
      %v907 = vpop.trf.xlu0
      %v908 = vpop.trf.xlu0
      %v909 = vpop.trf.xlu0
      %v910 = vpop.trf.xlu0
      %v911 = vpop.trf.xlu0
      %v912 = vpop.trf.xlu0
      %v913 = vpop.trf.xlu0
      %v914 = vpop.trf.xlu0
      %v915 = vpop.trf.xlu0
      %v916 = vpop.trf.xlu0
      %v917 = vpop.trf.xlu0
      %v918 = vpop.trf.xlu0
      %v919 = vpop.trf.xlu0
      %952 = vrot.lane.b32.xlu0 %v872, 2
      %v953 = vpop.permute.xlu0 %952
      %954 = vrot.lane.b32.xlu0 %v873, 2
      %v955 = vpop.permute.xlu0 %954
      %956 = vrot.lane.b32.xlu0 %v874, 2
      %v957 = vpop.permute.xlu0 %956
      %958 = vrot.lane.b32.xlu0 %v875, 2
      %v959 = vpop.permute.xlu0 %958
      %960 = vrot.lane.b32.xlu0 %v876, 2
      %v961 = vpop.permute.xlu0 %960
      %962 = vrot.lane.b32.xlu0 %v877, 2
      %v963 = vpop.permute.xlu0 %962
      %964 = vrot.lane.b32.xlu0 %v878, 2
      %v965 = vpop.permute.xlu0 %964
      %966 = vrot.lane.b32.xlu0 %v879, 2
      %v967 = vpop.permute.xlu0 %966
      %968 = vrot.lane.b32.xlu0 %v880, 2
      %v969 = vpop.permute.xlu0 %968
      %970 = vrot.lane.b32.xlu0 %v881, 2
      %v971 = vpop.permute.xlu0 %970
      %972 = vrot.lane.b32.xlu0 %v882, 2
      %v973 = vpop.permute.xlu0 %972
      %974 = vrot.lane.b32.xlu0 %v883, 2
      %v975 = vpop.permute.xlu0 %974
      %976 = vrot.lane.b32.xlu0 %v884, 2
      %v977 = vpop.permute.xlu0 %976
      %978 = vrot.lane.b32.xlu0 %v885, 2
      %v979 = vpop.permute.xlu0 %978
      %980 = vrot.lane.b32.xlu0 %v886, 2
      %v981 = vpop.permute.xlu0 %980
      %982 = vrot.lane.b32.xlu0 %v887, 2
      %v983 = vpop.permute.xlu0 %982
      %984 = vrot.lane.b32.xlu0 %v904, 2
      %v985 = vpop.permute.xlu0 %984
      %986 = vrot.lane.b32.xlu0 %v905, 2
      %v987 = vpop.permute.xlu0 %986
      %988 = vrot.lane.b32.xlu0 %v906, 2
      %v989 = vpop.permute.xlu0 %988
      %990 = vrot.lane.b32.xlu0 %v907, 2
      %v991 = vpop.permute.xlu0 %990
      %992 = vrot.lane.b32.xlu0 %v908, 2
      %v993 = vpop.permute.xlu0 %992
      %994 = vrot.lane.b32.xlu0 %v909, 2
      %v995 = vpop.permute.xlu0 %994
      %996 = vrot.lane.b32.xlu0 %v910, 2
      %v997 = vpop.permute.xlu0 %996
      %998 = vrot.lane.b32.xlu0 %v911, 2
      %v999 = vpop.permute.xlu0 %998
      %1000 = vrot.lane.b32.xlu0 %v912, 2
      %v1001 = vpop.permute.xlu0 %1000
      %1002 = vrot.lane.b32.xlu0 %v913, 2
      %v1003 = vpop.permute.xlu0 %1002
      %1004 = vrot.lane.b32.xlu0 %v914, 2
      %v1005 = vpop.permute.xlu0 %1004
      %1006 = vrot.lane.b32.xlu0 %v915, 2
      %v1007 = vpop.permute.xlu0 %1006
      %1008 = vrot.lane.b32.xlu0 %v916, 2
      %v1009 = vpop.permute.xlu0 %1008
      %1010 = vrot.lane.b32.xlu0 %v917, 2
      %v1011 = vpop.permute.xlu0 %1010
      %1012 = vrot.lane.b32.xlu0 %v918, 2
      %v1013 = vpop.permute.xlu0 %1012
      %1014 = vrot.lane.b32.xlu0 %v919, 2
      %v1015 = vpop.permute.xlu0 %1014
      %1048 = vst.msk [vmem:[%s817] sm:$0xff] %vm720, %v953
      %1049 = vst.msk [vmem:[%s817 + $0x8] sm:$0xff] %vm720, %v955
      %1050 = vst.msk [vmem:[%s817 + $0x10] sm:$0xff] %vm720, %v957
      %1051 = vst.msk [vmem:[%s817 + $0x18] sm:$0xff] %vm720, %v959
      %1052 = vst.msk [vmem:[%s817 + $0x20] sm:$0xff] %vm720, %v961
      %1053 = vst.msk [vmem:[%s817 + $0x28] sm:$0xff] %vm720, %v963
      %1054 = vst.msk [vmem:[%s817 + $0x30] sm:$0xff] %vm720, %v965
      %1055 = vst.msk [vmem:[%s817 + $0x38] sm:$0xff] %vm720, %v967
      %1056 = vst.msk [vmem:[%s817 + $0x40] sm:$0xff] %vm720, %v969
      %1057 = vst.msk [vmem:[%s817 + $0x48] sm:$0xff] %vm720, %v971
      %1058 = vst.msk [vmem:[%s817 + $0x50] sm:$0xff] %vm720, %v973
      %1059 = vst.msk [vmem:[%s817 + $0x58] sm:$0xff] %vm720, %v975
      %1060 = vst.msk [vmem:[%s817 + $0x60] sm:$0xff] %vm720, %v977
      %1061 = vst.msk [vmem:[%s817 + $0x68] sm:$0xff] %vm720, %v979
      %1062 = vst.msk [vmem:[%s817 + $0x70] sm:$0xff] %vm720, %v981
      %1063 = vst.msk [vmem:[%s817 + $0x78] sm:$0xff] %vm720, %v983
      %1064 = vst.msk [vmem:[%s817 + $0x80] sm:$0xff] %vm720, %v985
      %1065 = vst.msk [vmem:[%s817 + $0x88] sm:$0xff] %vm720, %v987
      %1066 = vst.msk [vmem:[%s817 + $0x90] sm:$0xff] %vm720, %v989
      %1067 = vst.msk [vmem:[%s817 + $0x98] sm:$0xff] %vm720, %v991
      %1068 = vst.msk [vmem:[%s817 + $0xa0] sm:$0xff] %vm720, %v993
      %1069 = vst.msk [vmem:[%s817 + $0xa8] sm:$0xff] %vm720, %v995
      %1070 = vst.msk [vmem:[%s817 + $0xb0] sm:$0xff] %vm720, %v997
      %1071 = vst.msk [vmem:[%s817 + $0xb8] sm:$0xff] %vm720, %v999
      %1072 = vst.msk [vmem:[%s817 + $0xc0] sm:$0xff] %vm720, %v1001
      %1073 = vst.msk [vmem:[%s817 + $0xc8] sm:$0xff] %vm720, %v1003
      %1074 = vst.msk [vmem:[%s817 + $0xd0] sm:$0xff] %vm720, %v1005
      %1075 = vst.msk [vmem:[%s817 + $0xd8] sm:$0xff] %vm720, %v1007
      %1076 = vst.msk [vmem:[%s817 + $0xe0] sm:$0xff] %vm720, %v1009
      %1077 = vst.msk [vmem:[%s817 + $0xe8] sm:$0xff] %vm720, %v1011
      %1078 = vst.msk [vmem:[%s817 + $0xf0] sm:$0xff] %vm720, %v1013
      %1079 = vst.msk [vmem:[%s817 + $0xf8] sm:$0xff] %vm720, %v1015
      %1080 = vxpose.xlu0.b32.start [1/16] %v384, 128
      %1081 = vxpose.xlu0.b32.cont [2/16] 0.0, 128
      %1082 = vxpose.xlu0.b32.cont [3/16] 0.0, 128
      %1083 = vxpose.xlu0.b32.cont [4/16] 0.0, 128
      %1084 = vxpose.xlu0.b32.cont [5/16] 0.0, 128
      %1085 = vxpose.xlu0.b32.cont [6/16] 0.0, 128
      %1086 = vxpose.xlu0.b32.cont [7/16] 0.0, 128
      %1087 = vxpose.xlu0.b32.cont [8/16] 0.0, 128
      %1088 = vxpose.xlu0.b32.cont [9/16] 0.0, 128
      %1089 = vxpose.xlu0.b32.cont [10/16] 0.0, 128
      %1090 = vxpose.xlu0.b32.cont [11/16] 0.0, 128
      %1091 = vxpose.xlu0.b32.cont [12/16] 0.0, 128
      %1092 = vxpose.xlu0.b32.cont [13/16] 0.0, 128
      %1093 = vxpose.xlu0.b32.cont [14/16] 0.0, 128
      %1094 = vxpose.xlu0.b32.cont [15/16] 0.0, 128
      %1095 = vxpose.xlu0.b32.end [16/16] 0.0, 128
      %v1096 = vpop.trf.xlu0
      %v1097 = vpop.trf.xlu0
      %v1098 = vpop.trf.xlu0
      %v1099 = vpop.trf.xlu0
      %v1100 = vpop.trf.xlu0
      %v1101 = vpop.trf.xlu0
      %v1102 = vpop.trf.xlu0
      %v1103 = vpop.trf.xlu0
      %v1104 = vpop.trf.xlu0
      %v1105 = vpop.trf.xlu0
      %v1106 = vpop.trf.xlu0
      %v1107 = vpop.trf.xlu0
      %v1108 = vpop.trf.xlu0
      %v1109 = vpop.trf.xlu0
      %v1110 = vpop.trf.xlu0
      %v1111 = vpop.trf.xlu0
      %1112 = vxpose.xlu0.b32.start [1/16] %v385, 128
      %1113 = vxpose.xlu0.b32.cont [2/16] 0.0, 128
      %1114 = vxpose.xlu0.b32.cont [3/16] 0.0, 128
      %1115 = vxpose.xlu0.b32.cont [4/16] 0.0, 128
      %1116 = vxpose.xlu0.b32.cont [5/16] 0.0, 128
      %1117 = vxpose.xlu0.b32.cont [6/16] 0.0, 128
      %1118 = vxpose.xlu0.b32.cont [7/16] 0.0, 128
      %1119 = vxpose.xlu0.b32.cont [8/16] 0.0, 128
      %1120 = vxpose.xlu0.b32.cont [9/16] 0.0, 128
      %1121 = vxpose.xlu0.b32.cont [10/16] 0.0, 128
      %1122 = vxpose.xlu0.b32.cont [11/16] 0.0, 128
      %1123 = vxpose.xlu0.b32.cont [12/16] 0.0, 128
      %1124 = vxpose.xlu0.b32.cont [13/16] 0.0, 128
      %1125 = vxpose.xlu0.b32.cont [14/16] 0.0, 128
      %1126 = vxpose.xlu0.b32.cont [15/16] 0.0, 128
      %1127 = vxpose.xlu0.b32.end [16/16] 0.0, 128
      %v1128 = vpop.trf.xlu0
      %v1129 = vpop.trf.xlu0
      %v1130 = vpop.trf.xlu0
      %v1131 = vpop.trf.xlu0
      %v1132 = vpop.trf.xlu0
      %v1133 = vpop.trf.xlu0
      %v1134 = vpop.trf.xlu0
      %v1135 = vpop.trf.xlu0
      %v1136 = vpop.trf.xlu0
      %v1137 = vpop.trf.xlu0
      %v1138 = vpop.trf.xlu0
      %v1139 = vpop.trf.xlu0
      %v1140 = vpop.trf.xlu0
      %v1141 = vpop.trf.xlu0
      %v1142 = vpop.trf.xlu0
      %v1143 = vpop.trf.xlu0
      %s1144 = scalar_lea.vmem %s227, 512
      %1145 = vst.msk [vmem:[%s1144] sm:$0xff] %vm489, %v1096
      %1146 = vst.msk [vmem:[%s1144 + $0x8] sm:$0xff] %vm489, %v1097
      %1147 = vst.msk [vmem:[%s1144 + $0x10] sm:$0xff] %vm489, %v1098
      %1148 = vst.msk [vmem:[%s1144 + $0x18] sm:$0xff] %vm489, %v1099
      %1149 = vst.msk [vmem:[%s1144 + $0x20] sm:$0xff] %vm489, %v1100
      %1150 = vst.msk [vmem:[%s1144 + $0x28] sm:$0xff] %vm489, %v1101
      %1151 = vst.msk [vmem:[%s1144 + $0x30] sm:$0xff] %vm489, %v1102
      %1152 = vst.msk [vmem:[%s1144 + $0x38] sm:$0xff] %vm489, %v1103
      %1153 = vst.msk [vmem:[%s1144 + $0x40] sm:$0xff] %vm489, %v1104
      %1154 = vst.msk [vmem:[%s1144 + $0x48] sm:$0xff] %vm489, %v1105
      %1155 = vst.msk [vmem:[%s1144 + $0x50] sm:$0xff] %vm489, %v1106
      %1156 = vst.msk [vmem:[%s1144 + $0x58] sm:$0xff] %vm489, %v1107
      %1157 = vst.msk [vmem:[%s1144 + $0x60] sm:$0xff] %vm489, %v1108
      %1158 = vst.msk [vmem:[%s1144 + $0x68] sm:$0xff] %vm489, %v1109
      %1159 = vst.msk [vmem:[%s1144 + $0x70] sm:$0xff] %vm489, %v1110
      %1160 = vst.msk [vmem:[%s1144 + $0x78] sm:$0xff] %vm489, %v1111
      %1161 = vst.msk [vmem:[%s1144 + $0x80] sm:$0xff] %vm489, %v1128
      %1162 = vst.msk [vmem:[%s1144 + $0x88] sm:$0xff] %vm489, %v1129
      %1163 = vst.msk [vmem:[%s1144 + $0x90] sm:$0xff] %vm489, %v1130
      %1164 = vst.msk [vmem:[%s1144 + $0x98] sm:$0xff] %vm489, %v1131
      %1165 = vst.msk [vmem:[%s1144 + $0xa0] sm:$0xff] %vm489, %v1132
      %1166 = vst.msk [vmem:[%s1144 + $0xa8] sm:$0xff] %vm489, %v1133
      %1167 = vst.msk [vmem:[%s1144 + $0xb0] sm:$0xff] %vm489, %v1134
      %1168 = vst.msk [vmem:[%s1144 + $0xb8] sm:$0xff] %vm489, %v1135
      %1169 = vst.msk [vmem:[%s1144 + $0xc0] sm:$0xff] %vm489, %v1136
      %1170 = vst.msk [vmem:[%s1144 + $0xc8] sm:$0xff] %vm489, %v1137
      %1171 = vst.msk [vmem:[%s1144 + $0xd0] sm:$0xff] %vm489, %v1138
      %1172 = vst.msk [vmem:[%s1144 + $0xd8] sm:$0xff] %vm489, %v1139
      %1173 = vst.msk [vmem:[%s1144 + $0xe0] sm:$0xff] %vm489, %v1140
      %1174 = vst.msk [vmem:[%s1144 + $0xe8] sm:$0xff] %vm489, %v1141
      %1175 = vst.msk [vmem:[%s1144 + $0xf0] sm:$0xff] %vm489, %v1142
      %1176 = vst.msk [vmem:[%s1144 + $0xf8] sm:$0xff] %vm489, %v1143
      %v1179 = vrot.slane %v423, 2
      %v1180 = vrot.slane %v424, 2
      %1183 = vxpose.xlu0.b32.start [1/16] %v1179, 128
      %1184 = vxpose.xlu0.b32.cont [2/16] 0.0, 128
      %1185 = vxpose.xlu0.b32.cont [3/16] 0.0, 128
      %1186 = vxpose.xlu0.b32.cont [4/16] 0.0, 128
      %1187 = vxpose.xlu0.b32.cont [5/16] 0.0, 128
      %1188 = vxpose.xlu0.b32.cont [6/16] 0.0, 128
      %1189 = vxpose.xlu0.b32.cont [7/16] 0.0, 128
      %1190 = vxpose.xlu0.b32.cont [8/16] 0.0, 128
      %1191 = vxpose.xlu0.b32.cont [9/16] 0.0, 128
      %1192 = vxpose.xlu0.b32.cont [10/16] 0.0, 128
      %1193 = vxpose.xlu0.b32.cont [11/16] 0.0, 128
      %1194 = vxpose.xlu0.b32.cont [12/16] 0.0, 128
      %1195 = vxpose.xlu0.b32.cont [13/16] 0.0, 128
      %1196 = vxpose.xlu0.b32.cont [14/16] 0.0, 128
      %1197 = vxpose.xlu0.b32.cont [15/16] 0.0, 128
      %1198 = vxpose.xlu0.b32.end [16/16] 0.0, 128
      %v1199 = vpop.trf.xlu0
      %v1200 = vpop.trf.xlu0
      %v1201 = vpop.trf.xlu0
      %v1202 = vpop.trf.xlu0
      %v1203 = vpop.trf.xlu0
      %v1204 = vpop.trf.xlu0
      %v1205 = vpop.trf.xlu0
      %v1206 = vpop.trf.xlu0
      %v1207 = vpop.trf.xlu0
      %v1208 = vpop.trf.xlu0
      %v1209 = vpop.trf.xlu0
      %v1210 = vpop.trf.xlu0
      %v1211 = vpop.trf.xlu0
      %v1212 = vpop.trf.xlu0
      %v1213 = vpop.trf.xlu0
      %v1214 = vpop.trf.xlu0
      %1215 = vxpose.xlu0.b32.start [1/16] %v1180, 128
      %1216 = vxpose.xlu0.b32.cont [2/16] 0.0, 128
      %1217 = vxpose.xlu0.b32.cont [3/16] 0.0, 128
      %1218 = vxpose.xlu0.b32.cont [4/16] 0.0, 128
      %1219 = vxpose.xlu0.b32.cont [5/16] 0.0, 128
      %1220 = vxpose.xlu0.b32.cont [6/16] 0.0, 128
      %1221 = vxpose.xlu0.b32.cont [7/16] 0.0, 128
      %1222 = vxpose.xlu0.b32.cont [8/16] 0.0, 128
      %1223 = vxpose.xlu0.b32.cont [9/16] 0.0, 128
      %1224 = vxpose.xlu0.b32.cont [10/16] 0.0, 128
      %1225 = vxpose.xlu0.b32.cont [11/16] 0.0, 128
      %1226 = vxpose.xlu0.b32.cont [12/16] 0.0, 128
      %1227 = vxpose.xlu0.b32.cont [13/16] 0.0, 128
      %1228 = vxpose.xlu0.b32.cont [14/16] 0.0, 128
      %1229 = vxpose.xlu0.b32.cont [15/16] 0.0, 128
      %1230 = vxpose.xlu0.b32.end [16/16] 0.0, 128
      %v1231 = vpop.trf.xlu0
      %v1232 = vpop.trf.xlu0
      %v1233 = vpop.trf.xlu0
      %v1234 = vpop.trf.xlu0
      %v1235 = vpop.trf.xlu0
      %v1236 = vpop.trf.xlu0
      %v1237 = vpop.trf.xlu0
      %v1238 = vpop.trf.xlu0
      %v1239 = vpop.trf.xlu0
      %v1240 = vpop.trf.xlu0
      %v1241 = vpop.trf.xlu0
      %v1242 = vpop.trf.xlu0
      %v1243 = vpop.trf.xlu0
      %v1244 = vpop.trf.xlu0
      %v1245 = vpop.trf.xlu0
      %v1246 = vpop.trf.xlu0
      %1279 = vrot.lane.b32.xlu0 %v1199, 2
      %v1280 = vpop.permute.xlu0 %1279
      %1281 = vrot.lane.b32.xlu0 %v1200, 2
      %v1282 = vpop.permute.xlu0 %1281
      %1283 = vrot.lane.b32.xlu0 %v1201, 2
      %v1284 = vpop.permute.xlu0 %1283
      %1285 = vrot.lane.b32.xlu0 %v1202, 2
      %v1286 = vpop.permute.xlu0 %1285
      %1287 = vrot.lane.b32.xlu0 %v1203, 2
      %v1288 = vpop.permute.xlu0 %1287
      %1289 = vrot.lane.b32.xlu0 %v1204, 2
      %v1290 = vpop.permute.xlu0 %1289
      %1291 = vrot.lane.b32.xlu0 %v1205, 2
      %v1292 = vpop.permute.xlu0 %1291
      %1293 = vrot.lane.b32.xlu0 %v1206, 2
      %v1294 = vpop.permute.xlu0 %1293
      %1295 = vrot.lane.b32.xlu0 %v1207, 2
      %v1296 = vpop.permute.xlu0 %1295
      %1297 = vrot.lane.b32.xlu0 %v1208, 2
      %v1298 = vpop.permute.xlu0 %1297
      %1299 = vrot.lane.b32.xlu0 %v1209, 2
      %v1300 = vpop.permute.xlu0 %1299
      %1301 = vrot.lane.b32.xlu0 %v1210, 2
      %v1302 = vpop.permute.xlu0 %1301
      %1303 = vrot.lane.b32.xlu0 %v1211, 2
      %v1304 = vpop.permute.xlu0 %1303
      %1305 = vrot.lane.b32.xlu0 %v1212, 2
      %v1306 = vpop.permute.xlu0 %1305
      %1307 = vrot.lane.b32.xlu0 %v1213, 2
      %v1308 = vpop.permute.xlu0 %1307
      %1309 = vrot.lane.b32.xlu0 %v1214, 2
      %v1310 = vpop.permute.xlu0 %1309
      %1311 = vrot.lane.b32.xlu0 %v1231, 2
      %v1312 = vpop.permute.xlu0 %1311
      %1313 = vrot.lane.b32.xlu0 %v1232, 2
      %v1314 = vpop.permute.xlu0 %1313
      %1315 = vrot.lane.b32.xlu0 %v1233, 2
      %v1316 = vpop.permute.xlu0 %1315
      %1317 = vrot.lane.b32.xlu0 %v1234, 2
      %v1318 = vpop.permute.xlu0 %1317
      %1319 = vrot.lane.b32.xlu0 %v1235, 2
      %v1320 = vpop.permute.xlu0 %1319
      %1321 = vrot.lane.b32.xlu0 %v1236, 2
      %v1322 = vpop.permute.xlu0 %1321
      %1323 = vrot.lane.b32.xlu0 %v1237, 2
      %v1324 = vpop.permute.xlu0 %1323
      %1325 = vrot.lane.b32.xlu0 %v1238, 2
      %v1326 = vpop.permute.xlu0 %1325
      %1327 = vrot.lane.b32.xlu0 %v1239, 2
      %v1328 = vpop.permute.xlu0 %1327
      %1329 = vrot.lane.b32.xlu0 %v1240, 2
      %v1330 = vpop.permute.xlu0 %1329
      %1331 = vrot.lane.b32.xlu0 %v1241, 2
      %v1332 = vpop.permute.xlu0 %1331
      %1333 = vrot.lane.b32.xlu0 %v1242, 2
      %v1334 = vpop.permute.xlu0 %1333
      %1335 = vrot.lane.b32.xlu0 %v1243, 2
      %v1336 = vpop.permute.xlu0 %1335
      %1337 = vrot.lane.b32.xlu0 %v1244, 2
      %v1338 = vpop.permute.xlu0 %1337
      %1339 = vrot.lane.b32.xlu0 %v1245, 2
      %v1340 = vpop.permute.xlu0 %1339
      %1341 = vrot.lane.b32.xlu0 %v1246, 2
      %v1342 = vpop.permute.xlu0 %1341
      %1375 = vst.msk [vmem:[%s1144] sm:$0xff] %vm720, %v1280
      %1376 = vst.msk [vmem:[%s1144 + $0x8] sm:$0xff] %vm720, %v1282
      %1377 = vst.msk [vmem:[%s1144 + $0x10] sm:$0xff] %vm720, %v1284
      %1378 = vst.msk [vmem:[%s1144 + $0x18] sm:$0xff] %vm720, %v1286
      %1379 = vst.msk [vmem:[%s1144 + $0x20] sm:$0xff] %vm720, %v1288
      %1380 = vst.msk [vmem:[%s1144 + $0x28] sm:$0xff] %vm720, %v1290
      %1381 = vst.msk [vmem:[%s1144 + $0x30] sm:$0xff] %vm720, %v1292
      %1382 = vst.msk [vmem:[%s1144 + $0x38] sm:$0xff] %vm720, %v1294
      %1383 = vst.msk [vmem:[%s1144 + $0x40] sm:$0xff] %vm720, %v1296
      %1384 = vst.msk [vmem:[%s1144 + $0x48] sm:$0xff] %vm720, %v1298
      %1385 = vst.msk [vmem:[%s1144 + $0x50] sm:$0xff] %vm720, %v1300
      %1386 = vst.msk [vmem:[%s1144 + $0x58] sm:$0xff] %vm720, %v1302
      %1387 = vst.msk [vmem:[%s1144 + $0x60] sm:$0xff] %vm720, %v1304
      %1388 = vst.msk [vmem:[%s1144 + $0x68] sm:$0xff] %vm720, %v1306
      %1389 = vst.msk [vmem:[%s1144 + $0x70] sm:$0xff] %vm720, %v1308
      %1390 = vst.msk [vmem:[%s1144 + $0x78] sm:$0xff] %vm720, %v1310
      %1391 = vst.msk [vmem:[%s1144 + $0x80] sm:$0xff] %vm720, %v1312
      %1392 = vst.msk [vmem:[%s1144 + $0x88] sm:$0xff] %vm720, %v1314
      %1393 = vst.msk [vmem:[%s1144 + $0x90] sm:$0xff] %vm720, %v1316
      %1394 = vst.msk [vmem:[%s1144 + $0x98] sm:$0xff] %vm720, %v1318
      %1395 = vst.msk [vmem:[%s1144 + $0xa0] sm:$0xff] %vm720, %v1320
      %1396 = vst.msk [vmem:[%s1144 + $0xa8] sm:$0xff] %vm720, %v1322
      %1397 = vst.msk [vmem:[%s1144 + $0xb0] sm:$0xff] %vm720, %v1324
      %1398 = vst.msk [vmem:[%s1144 + $0xb8] sm:$0xff] %vm720, %v1326
      %1399 = vst.msk [vmem:[%s1144 + $0xc0] sm:$0xff] %vm720, %v1328
      %1400 = vst.msk [vmem:[%s1144 + $0xc8] sm:$0xff] %vm720, %v1330
      %1401 = vst.msk [vmem:[%s1144 + $0xd0] sm:$0xff] %vm720, %v1332
      %1402 = vst.msk [vmem:[%s1144 + $0xd8] sm:$0xff] %vm720, %v1334
      %1403 = vst.msk [vmem:[%s1144 + $0xe0] sm:$0xff] %vm720, %v1336
      %1404 = vst.msk [vmem:[%s1144 + $0xe8] sm:$0xff] %vm720, %v1338
      %1405 = vst.msk [vmem:[%s1144 + $0xf0] sm:$0xff] %vm720, %v1340
      %1406 = vst.msk [vmem:[%s1144 + $0xf8] sm:$0xff] %vm720, %v1342
      %s1407 = smul.u32 32, %s19
      %p1408 = scmp.lt.s32.totalorder %s18, 1
      %s1409 = scalar_select %p1408, %s18, 1
      %p1410 = scmp.lt.s32.totalorder %s1407, 31
      %s1411 = scalar_select %p1410, %s1407, 31
      %s1412 = smul.addr %s1409, 96
      %s1413 = sadd.s32 %s1411, %s1412
      %s1414 = smul.addr %s1413, 8
      %s1415 = scalar_lea.vmem %s3, %s1414
      // Predicated region
      $region33: #{tpu_custom_call.1} parent=31 // pred_check
        %p1416 = pneg %p121
      $region34: #{tpu_custom_call.1} parent=31 // pred_check_branch
        %1418 = sbr.rel (%p1416) target = $region36
      $region35: #{tpu_custom_call.1} parent=31 // pred_region
        %s1419 = smul.u32 32, %s19
      $region36: #{tpu_custom_call.1} parent=31 // pred_fallthru
        _
    $region32: #{tpu_custom_call.1} parent=5 // pred_fallthru
      _
    %p1420 = scmp.le.s32.totalorder 2, %s9
    // Predicated region
    $region37: #{tpu_custom_call.1} parent=5 // pred_check
      %p1421 = pneg %p1420
    $region38: #{tpu_custom_call.1} parent=5 // pred_check_branch
      %1423 = sbr.rel (%p1421) target = $region40
    $region39: #{tpu_custom_call.1} parent=5 // pred_region
      %s1424 = ssub.s32 %s9, 2
      // Predicated region
      $region41: #{tpu_custom_call.1} parent=39 // pred_check
        %p1425 = pneg %p127
      $region42: #{tpu_custom_call.1} parent=39 // pred_check_branch
        %1427 = sbr.rel (%p1425) target = $region44
      $region43: #{tpu_custom_call.1} parent=39 // pred_region
        %s1428 = smul.u32 32, %s21
        %p1429 = scmp.lt.s32.totalorder %s20, 1
        %s1430 = scalar_select %p1429, %s20, 1
        %p1431 = scmp.lt.s32.totalorder %s1428, 31
        %s1432 = scalar_select %p1431, %s1428, 31
        %s1433 = smul.addr %s1430, 96
        %s1434 = sadd.s32 %s1432, %s1433
        %s1435 = smul.addr %s1434, 8
        %s1436 = scalar_lea.vmem %s3, %s1435
      $region44: #{tpu_custom_call.1} parent=39 // pred_fallthru
        _
    $region40: #{tpu_custom_call.1} parent=5 // pred_fallthru
      _
  $region6: #{tpu_custom_call.1} parent=0 // loop_footer
    %s13 = sadd.s32 1, %s9
  $region7: #{tpu_custom_call.1} parent=0 // loop_footer_branch
    %8 = sbr.rel target = $region3
  $region8: #{tpu_custom_call.1} parent=0 // loop_exit
    _

// kernel: tpu_custom_call.1
$region0: #{tpu_custom_call.1}
  #allocation0 [shape = 'u32[]', space=smem, size = 0x4, offset = 0x4, fixed_abs, tag = 'smem constant byte address 0x4 - core index']
  #allocation1 [shape = 'u32[72,128]{1,0:T(1,128)}', space=vmem, size = 0x9000, scoped, tag = 'internal scratch']
  %s0 = inlined_call_operand.vmem [shape: f32[2,3,7,256], index: 0, kind: input, shape index: {}]
  %s1 = inlined_call_operand.vmem [shape: f32[2,1,256], index: 1, kind: input, shape index: {}]
  %s2 = inlined_call_operand.vmem [shape: f32[3,7,1], index: 2, kind: input, shape index: {}]
  %s3 = inlined_call_operand.vmem [shape: f32[2,3,7,256], index: 3, kind: output, shape index: {}]
  %s4 = sld [smem:[#allocation0]]
  $region45: #{tpu_custom_call.1} parent=0
    _
  %s6 = ssub.s32 1, %s4
  %s7 = scalar_select 0, %s6, %s4
  loop: start=0, step=1, limit=4
  $region2: #{tpu_custom_call.1} parent=0 // loop_pre_header
    _
  $region3: #{tpu_custom_call.1} parent=0 // loop_header
    %s9 = sphi 0, %s13
    %p10 = scmp.ge.s32.totalorder %s9, 4
    %s16 = sphi 0, %s28
    %s17 = sphi 0, %s24
    %s18 = sphi 0, %s16
    %s19 = sphi 0, %s17
    %s20 = sphi 0, %s18
    %s21 = sphi 0, %s19
    %s33 = sphi 0, %s35
    %s36 = sphi 0, %s33
    %s37 = sphi 0, %s36
    %s53 = sphi 0, %s37
    %s59 = sphi 0, %s61
    %s62 = sphi 0, %s59
    %s63 = sphi 0, %s62
    %s79 = sphi 0, %s63
    %s83 = sphi 0, %s83
    %s85 = sphi 0, %s83
    %s86 = sphi 0, %s85
    %s100 = sphi 0, %s86
    %s108 = sphi 0, %s110
    %s111 = sphi 0, %s108
    %s112 = sphi 0, %s111
    %s128 = sphi 0, %s112
  $region4: #{tpu_custom_call.1} parent=0 // loop_header_branch
    %12 = sbr.rel (%p10) target = $region8
  $region5: #{tpu_custom_call.1} parent=0 // loop_body
    %s14 = ssub.s32 %s9, 1
    %s15 = ssub.s32 %s9, 2
    %s22 = sadd.s32 1, %s17
    %p23 = scmp.ge.s32.totalorder %s22, 1
    %s24 = scalar_select %p23, 0, %s22
    %s25 = sadd.s32 1, %s16
    %s26 = scalar_select %p23, %s25, %s16
    %p27 = scmp.ge.s32.totalorder %s26, 2
    %s28 = scalar_select %p27, 0, %s26
    %s29 = ssub.s32 %s16, %s28
    %s30 = ssub.s32 %s17, %s24
    %s31 = sor.u32 %s29, %s30
    %p32 = scmp.eq.s32.totalorder %s31, 0
    %s34 = sadd.s32 %s33, 1
    %s35 = scalar_select %p32, %s33, %s34
    %p38 = pneg %p32
    %p39 = scmp.eq.s32.totalorder %s9, 1
    %p40 = por %p38, %p39
    %p41 = scmp.ne.s32.totalorder %s33, %s36
    %p42 = scmp.eq.s32.totalorder %s9, 0
    %p43 = por %p41, %p42
    %p44 = scmp.ne.s32.totalorder %s33, %s36
    %p45 = scmp.eq.s32.totalorder %s14, 1
    %p46 = por %p44, %p45
    %p47 = scmp.ne.s32.totalorder %s36, %s37
    %p48 = scmp.eq.s32.totalorder %s14, 0
    %p49 = por %p47, %p48
    %p50 = scmp.ne.s32.totalorder %s36, %s37
    %p51 = scmp.eq.s32.totalorder %s15, 1
    %p52 = por %p50, %p51
    %p54 = scmp.ne.s32.totalorder %s37, %s53
    %p55 = scmp.eq.s32.totalorder %s15, 0
    %p56 = por %p54, %p55
    %s57 = ssub.s32 %s17, %s24
    %p58 = scmp.eq.s32.totalorder %s57, 0
    %s60 = sadd.s32 %s59, 1
    %s61 = scalar_select %p58, %s59, %s60
    %p64 = pneg %p58
    %p65 = scmp.eq.s32.totalorder %s9, 1
    %p66 = por %p64, %p65
    %p67 = scmp.ne.s32.totalorder %s59, %s62
    %p68 = scmp.eq.s32.totalorder %s9, 0
    %p69 = por %p67, %p68
    %p70 = scmp.ne.s32.totalorder %s59, %s62
    %p71 = scmp.eq.s32.totalorder %s14, 1
    %p72 = por %p70, %p71
    %p73 = scmp.ne.s32.totalorder %s62, %s63
    %p74 = scmp.eq.s32.totalorder %s14, 0
    %p75 = por %p73, %p74
    %p76 = scmp.ne.s32.totalorder %s62, %s63
    %p77 = scmp.eq.s32.totalorder %s15, 1
    %p78 = por %p76, %p77
    %p80 = scmp.ne.s32.totalorder %s63, %s79
    %p81 = scmp.eq.s32.totalorder %s15, 0
    %p82 = por %p80, %p81
    %s84 = sadd.s32 %s83, 1
    %p87 = scmp.eq.s32.totalorder %s9, 1
    %p88 = scmp.ne.s32.totalorder %s83, %s85
    %p89 = scmp.eq.s32.totalorder %s9, 0
    %p90 = por %p88, %p89
    %p91 = scmp.ne.s32.totalorder %s83, %s85
    %p92 = scmp.eq.s32.totalorder %s14, 1
    %p93 = por %p91, %p92
    %p94 = scmp.ne.s32.totalorder %s85, %s86
    %p95 = scmp.eq.s32.totalorder %s14, 0
    %p96 = por %p94, %p95
    %p97 = scmp.ne.s32.totalorder %s85, %s86
    %p98 = scmp.eq.s32.totalorder %s15, 1
    %p99 = por %p97, %p98
    %p101 = scmp.ne.s32.totalorder %s86, %s100
    %p102 = scmp.eq.s32.totalorder %s15, 0
    %p103 = por %p101, %p102
    %s104 = ssub.s32 %s16, %s28
    %s105 = ssub.s32 %s17, %s24
    %s106 = sor.u32 %s104, %s105
    %p107 = scmp.eq.s32.totalorder %s106, 0
    %s109 = sadd.s32 %s108, 1
    %s110 = scalar_select %p107, %s108, %s109
    %p113 = pneg %p107
    %p114 = scmp.eq.s32.totalorder %s9, 1
    %p115 = por %p113, %p114
    %p116 = scmp.ne.s32.totalorder %s108, %s111
    %p117 = scmp.eq.s32.totalorder %s9, 0
    %p118 = por %p116, %p117
    %p119 = scmp.ne.s32.totalorder %s108, %s111
    %p120 = scmp.eq.s32.totalorder %s14, 1
    %p121 = por %p119, %p120
    %p122 = scmp.ne.s32.totalorder %s111, %s112
    %p123 = scmp.eq.s32.totalorder %s14, 0
    %p124 = por %p122, %p123
    %p125 = scmp.ne.s32.totalorder %s111, %s112
    %p126 = scmp.eq.s32.totalorder %s15, 1
    %p127 = por %p125, %p126
    %p129 = scmp.ne.s32.totalorder %s112, %s128
    %p130 = scmp.eq.s32.totalorder %s15, 0
    %p131 = por %p129, %p130
    %p132 = scmp.le.s32.totalorder 1, %s9
    %p133 = scmp.lt.s32.totalorder %s9, 3
    %p134 = pnand %p132, %p133
    %p135 = pneg %p134
    // Predicated region
    $region9: #{tpu_custom_call.1} parent=5 // pred_check
      _
    $region10: #{tpu_custom_call.1} parent=5 // pred_check_branch
      %137 = sbr.rel (%p134) target = $region12
    $region11: #{tpu_custom_call.1} parent=5 // pred_region
      %s138 = ssub.s32 %s9, 1
      // Predicated region
      $region13: #{tpu_custom_call.1} parent=11 // pred_check
        %p139 = pneg %p75
      $region14: #{tpu_custom_call.1} parent=11 // pred_check_branch
        %141 = sbr.rel (%p139) target = $region16
      $region15: #{tpu_custom_call.1} parent=11 // pred_region
        %s142 = smul.u32 2, %s19
        %p143 = scmp.lt.s32.totalorder %s142, 1
        %s144 = scalar_select %p143, %s142, 1
        %s145 = scalar_lea.vmem %s1, %s144
        %s146 = smul.u32 2, %s19
      $region16: #{tpu_custom_call.1} parent=11 // pred_fallthru
        _
      // Predicated region
      $region17: #{tpu_custom_call.1} parent=11 // pred_check
        %p147 = pneg %p96
      $region18: #{tpu_custom_call.1} parent=11 // pred_check_branch
        %149 = sbr.rel (%p147) target = $region20
      $region19: #{tpu_custom_call.1} parent=11 // pred_region
        _
      $region20: #{tpu_custom_call.1} parent=11 // pred_fallthru
        _
    $region12: #{tpu_custom_call.1} parent=5 // pred_fallthru
      _
    %p150 = scmp.lt.s32.totalorder %s9, 2
    // Predicated region
    $region21: #{tpu_custom_call.1} parent=5 // pred_check
      %p151 = pneg %p150
    $region22: #{tpu_custom_call.1} parent=5 // pred_check_branch
      %153 = sbr.rel (%p151) target = $region24
    $region23: #{tpu_custom_call.1} parent=5 // pred_region
      // Predicated region
      $region25: #{tpu_custom_call.1} parent=23 // pred_check
        %p154 = pneg %p43
      $region26: #{tpu_custom_call.1} parent=23 // pred_check_branch
        %156 = sbr.rel (%p154) target = $region28
      $region27: #{tpu_custom_call.1} parent=23 // pred_region
        %s157 = smul.u32 2, %s17
        %p158 = scmp.lt.s32.totalorder %s16, 1
        %s159 = scalar_select %p158, %s16, 1
        %p160 = scmp.lt.s32.totalorder %s157, 1
        %s161 = scalar_select %p160, %s157, 1
        %s162 = smul.addr %s159, 6
        %s163 = sadd.s32 %s161, %s162
        %s164 = smul.addr %s163, 8
        %s165 = scalar_lea.vmem %s0, %s164
        %s166 = smul.u32 2, %s17
      $region28: #{tpu_custom_call.1} parent=23 // pred_fallthru
        _
    $region24: #{tpu_custom_call.1} parent=5 // pred_fallthru
      _
    %p167 = scmp.le.s32.totalorder 1, %s9
    %p168 = scmp.lt.s32.totalorder %s9, 3
    %p169 = pnand %p167, %p168
    %p170 = pneg %p169
    // Predicated region
    $region29: #{tpu_custom_call.1} parent=5 // pred_check
      _
    $region30: #{tpu_custom_call.1} parent=5 // pred_check_branch
      %172 = sbr.rel (%p169) target = $region32
    $region31: #{tpu_custom_call.1} parent=5 // pred_region
      %s173 = ssub.s32 %s9, 1
      %s174 = smul.u32 2, %s19
      %p175 = scmp.lt.s32.totalorder %s18, 1
      %s176 = scalar_select %p175, %s18, 1
      %p177 = scmp.lt.s32.totalorder %s174, 1
      %s178 = scalar_select %p177, %s174, 1
      %s179 = smul.addr %s176, 6
      %s180 = sadd.s32 %s178, %s179
      %s181 = smul.addr %s180, 8
      %s182 = scalar_lea.vmem %s0, %s181
      %p183 = pneg %p49
      %p184 = pneg %p46
      %s185 = smul.u32 2, %s19
      %p186 = scmp.lt.s32.totalorder %s185, 1
      %s187 = scalar_select %p186, %s185, 1
      %s188 = scalar_lea.vmem %s1, %s187
      %p189 = pneg %p75
      %p190 = pneg %p72
      %p191 = pneg %p96
      %p192 = pneg %p93
      %p193 = pneg %p124
      %p194 = pneg %p121
      %s195 = smul.u32 2, %s19
      %p196 = scmp.lt.s32.totalorder %s18, 1
      %s197 = scalar_select %p196, %s18, 1
      %p198 = scmp.lt.s32.totalorder %s195, 1
      %s199 = scalar_select %p198, %s195, 1
      %s200 = smul.addr %s197, 6
      %s201 = sadd.s32 %s199, %s200
      %s202 = smul.addr %s201, 8
      %s203 = scalar_lea.vmem %s3, %s202
      %s204 = smul.u32 2, %s19
      %p205 = scmp.lt.s32.totalorder %s18, 1
      %s206 = scalar_select %p205, %s18, 1
      %p207 = scmp.lt.s32.totalorder %s204, 1
      %s208 = scalar_select %p207, %s204, 1
      %s209 = smul.addr %s206, 6
      %s210 = sadd.s32 %s208, %s209
      %s211 = smul.addr %s210, 8
      %s212 = scalar_lea.vmem %s0, %s211
      %s213 = smul.u32 2, %s19
      %s214 = smul.u32 2, %s19
      %p215 = scmp.lt.s32.totalorder %s214, 1
      %s216 = scalar_select %p215, %s214, 1
      %s217 = scalar_lea.vmem %s1, %s216
      %s218 = smul.u32 2, %s19
      %s219 = smul.u32 2, %s19
      %p220 = scmp.lt.s32.totalorder %s18, 1
      %s221 = scalar_select %p220, %s18, 1
      %p222 = scmp.lt.s32.totalorder %s219, 1
      %s223 = scalar_select %p222, %s219, 1
      %s224 = smul.addr %s221, 6
      %s225 = sadd.s32 %s223, %s224
      %s226 = smul.addr %s225, 8
      %s227 = scalar_lea.vmem %s3, %s226
      %s228 = smul.u32 2, %s19
      %v229 = vld [vmem:[%s212] sm:$0x7f]
      %v230 = vld [vmem:[%s212 + $0x8] sm:$0x7f]
      %v231 = vld [vmem:[%s212 + $0x10] sm:$0x7f]
      %v232 = vld [vmem:[%s212 + $0x18] sm:$0x7f]
      %v233 = vld [vmem:[%s212 + $0x20] sm:$0x7f]
      %v234 = vld [vmem:[%s212 + $0x28] sm:$0x7f]
      %v235 = vxor.u32 %v229, 2147483648
      %v236 = vxor.u32 %v230, 2147483648
      %v237 = vxor.u32 %v231, 2147483648
      %v238 = vxor.u32 %v232, 2147483648
      %v239 = vxor.u32 %v233, 2147483648
      %v240 = vxor.u32 %v234, 2147483648
      %v241 = vmul.f32 %v235, 1.442695
      %v242 = vpow.pop %v241
      %v243 = vmul.f32 %v236, 1.442695
      %v244 = vpow.pop %v243
      %v245 = vmul.f32 %v237, 1.442695
      %v246 = vpow.pop %v245
      %v247 = vmul.f32 %v238, 1.442695
      %v248 = vpow.pop %v247
      %v249 = vmul.f32 %v239, 1.442695
      %v250 = vpow.pop %v249
      %v251 = vmul.f32 %v240, 1.442695
      %v252 = vpow.pop %v251
      %v253 = vadd.f32 %v242, 1.0
      %v254 = vadd.f32 %v244, 1.0
      %v255 = vadd.f32 %v246, 1.0
      %v256 = vadd.f32 %v248, 1.0
      %v257 = vadd.f32 %v250, 1.0
      %v258 = vadd.f32 %v252, 1.0
      %v259 = vrcp.pop %v253
      %v260 = vmul.f32 %v253, %v259
      %v261 = vsub.f32 1.0, %v260
      %v262 = vmul.f32 %v259, %v261
      %v263 = vadd.f32 %v259, %v262
      %vm264 = vweird.f32 %v253
      %vm265 = vweird.f32 %v259
      %vm266 = vmor %vm264, %vm265
      %v267 = vsel %vm266, %v259, %v263
      %v268 = vand.u32 2147483647, %v253
      %vm269 = vcmp.eq.f32.partialorder %v268, 8.507059e+37
      %v270 = vand.u32 %v253, 2147483648
      %v271 = vor.u32 1.1754944e-38, %v270
      %v272 = vsel %vm269, %v271, %v267
      %v273 = vmul.f32 1.0, %v272
      %v274 = vrcp.pop %v254
      %v275 = vmul.f32 %v254, %v274
      %v276 = vsub.f32 1.0, %v275
      %v277 = vmul.f32 %v274, %v276
      %v278 = vadd.f32 %v274, %v277
      %vm279 = vweird.f32 %v254
      %vm280 = vweird.f32 %v274
      %vm281 = vmor %vm279, %vm280
      %v282 = vsel %vm281, %v274, %v278
      %v283 = vand.u32 2147483647, %v254
      %vm284 = vcmp.eq.f32.partialorder %v283, 8.507059e+37
      %v285 = vand.u32 %v254, 2147483648
      %v286 = vor.u32 1.1754944e-38, %v285
      %v287 = vsel %vm284, %v286, %v282
      %v288 = vmul.f32 1.0, %v287
      %v289 = vrcp.pop %v255
      %v290 = vmul.f32 %v255, %v289
      %v291 = vsub.f32 1.0, %v290
      %v292 = vmul.f32 %v289, %v291
      %v293 = vadd.f32 %v289, %v292
      %vm294 = vweird.f32 %v255
      %vm295 = vweird.f32 %v289
      %vm296 = vmor %vm294, %vm295
      %v297 = vsel %vm296, %v289, %v293
      %v298 = vand.u32 2147483647, %v255
      %vm299 = vcmp.eq.f32.partialorder %v298, 8.507059e+37
      %v300 = vand.u32 %v255, 2147483648
      %v301 = vor.u32 1.1754944e-38, %v300
      %v302 = vsel %vm299, %v301, %v297
      %v303 = vmul.f32 1.0, %v302
      %v304 = vrcp.pop %v256
      %v305 = vmul.f32 %v256, %v304
      %v306 = vsub.f32 1.0, %v305
      %v307 = vmul.f32 %v304, %v306
      %v308 = vadd.f32 %v304, %v307
      %vm309 = vweird.f32 %v256
      %vm310 = vweird.f32 %v304
      %vm311 = vmor %vm309, %vm310
      %v312 = vsel %vm311, %v304, %v308
      %v313 = vand.u32 2147483647, %v256
      %vm314 = vcmp.eq.f32.partialorder %v313, 8.507059e+37
      %v315 = vand.u32 %v256, 2147483648
      %v316 = vor.u32 1.1754944e-38, %v315
      %v317 = vsel %vm314, %v316, %v312
      %v318 = vmul.f32 1.0, %v317
      %v319 = vrcp.pop %v257
      %v320 = vmul.f32 %v257, %v319
      %v321 = vsub.f32 1.0, %v320
      %v322 = vmul.f32 %v319, %v321
      %v323 = vadd.f32 %v319, %v322
      %vm324 = vweird.f32 %v257
      %vm325 = vweird.f32 %v319
      %vm326 = vmor %vm324, %vm325
      %v327 = vsel %vm326, %v319, %v323
      %v328 = vand.u32 2147483647, %v257
      %vm329 = vcmp.eq.f32.partialorder %v328, 8.507059e+37
      %v330 = vand.u32 %v257, 2147483648
      %v331 = vor.u32 1.1754944e-38, %v330
      %v332 = vsel %vm329, %v331, %v327
      %v333 = vmul.f32 1.0, %v332
      %v334 = vrcp.pop %v258
      %v335 = vmul.f32 %v258, %v334
      %v336 = vsub.f32 1.0, %v335
      %v337 = vmul.f32 %v334, %v336
      %v338 = vadd.f32 %v334, %v337
      %vm339 = vweird.f32 %v258
      %vm340 = vweird.f32 %v334
      %vm341 = vmor %vm339, %vm340
      %v342 = vsel %vm341, %v334, %v338
      %v343 = vand.u32 2147483647, %v258
      %vm344 = vcmp.eq.f32.partialorder %v343, 8.507059e+37
      %v345 = vand.u32 %v258, 2147483648
      %v346 = vor.u32 1.1754944e-38, %v345
      %v347 = vsel %vm344, %v346, %v342
      %v348 = vmul.f32 1.0, %v347
      %v349 = vmul.f32 %v229, 1.442695
      %v350 = vpow.pop %v349
      %v351 = vmul.f32 %v230, 1.442695
      %v352 = vpow.pop %v351
      %v353 = vmul.f32 %v231, 1.442695
      %v354 = vpow.pop %v353
      %v355 = vmul.f32 %v232, 1.442695
      %v356 = vpow.pop %v355
      %v357 = vmul.f32 %v233, 1.442695
      %v358 = vpow.pop %v357
      %v359 = vmul.f32 %v234, 1.442695
      %v360 = vpow.pop %v359
      %v361 = vlaneseq
      %v362 = vshrl.u32 %v361, 7
      %vm363 = vcmp.eq.s32.totalorder %v362, 0
      %v364 = vld [vmem:[%s217] sm:$0x3]
      %s365 = scalar_lea.vmem %s217, 2
      %v366 = vld [vmem:[%s365] sm:$0x3]
      %v368 = vperm.slane %v364, 0
      %v369 = vperm.slane %v364, 1
      %v373 = vperm.slane %v366, 0
      %v374 = vperm.slane %v366, 1
      %v377 = vsel %vm363, %v368, %v373
      %v378 = vsel %vm363, %v369, %v374
      %vm379 = vcmp.lt.s32.totalorder %v362, 2
      %v380 = vmul.f32 %v273, 26.0
      %v381 = vmul.f32 %v288, 26.0
      %v382 = vmul.f32 %v303, 26.0
      %v383 = vmul.f32 %v318, 26.0
      %v384 = vmul.f32 %v333, 26.0
      %v385 = vmul.f32 %v348, 26.0
      %v386 = vadd.f32 %v380, %v377
      %v387 = vadd.f32 %v381, %v378
      %v388 = vadd.f32 %v382, %v377
      %v389 = vadd.f32 %v383, %v378
      %v390 = vadd.f32 %v384, %v377
      %v391 = vadd.f32 %v385, %v378
      %vm392 = vcmp.lt.s32.totalorder %v362, 4
      %v393 = vld [vmem:[%s2] sm:$0x7f]
      %v394 = vld [vmem:[%s2 + $0x8] sm:$0x7f]
      %v395 = vld [vmem:[%s2 + $0x10] sm:$0x7f]
      %397 = vset.pattern.permute.xlu0 0
      %398 = vperm.xlu0 %397, %v393
      %v399 = vpop.permute.xlu0 %398
      %402 = vset.pattern.permute.xlu0 0
      %403 = vperm.xlu0 %402, %v394
      %v404 = vpop.permute.xlu0 %403
      %407 = vset.pattern.permute.xlu0 0
      %408 = vperm.xlu0 %407, %v395
      %v409 = vpop.permute.xlu0 %408
      %v411 = vmul.f32 %v350, %v399
      %v412 = vmul.f32 %v352, %v399
      %v413 = vmul.f32 %v354, %v404
      %v414 = vmul.f32 %v356, %v404
      %v415 = vmul.f32 %v358, %v409
      %v416 = vmul.f32 %v360, %v409
      %v417 = vsel %vm392, %v411, %v273
      %v418 = vsel %vm392, %v412, %v288
      %v419 = vsel %vm392, %v413, %v303
      %v420 = vsel %vm392, %v414, %v318
      %v421 = vsel %vm392, %v415, %v333
      %v422 = vsel %vm392, %v416, %v348
      %v423 = vsel %vm379, %v386, %v417
      %v424 = vsel %vm379, %v387, %v418
      %v425 = vsel %vm379, %v388, %v419
      %v426 = vsel %vm379, %v389, %v420
      %v427 = vsel %vm379, %v390, %v421
      %v428 = vsel %vm379, %v391, %v422
      %429 = vst [vmem:[%s227] sm:$0x7f] %v423
      %430 = vst [vmem:[%s227 + $0x8] sm:$0x7f] %v424
      %431 = vst [vmem:[%s227 + $0x10] sm:$0x7f] %v425
      %432 = vst [vmem:[%s227 + $0x18] sm:$0x7f] %v426
      %433 = vst [vmem:[%s227 + $0x20] sm:$0x7f] %v427
      %434 = vst [vmem:[%s227 + $0x28] sm:$0x7f] %v428
      %s435 = smul.u32 2, %s19
      %p436 = scmp.lt.s32.totalorder %s18, 1
      %s437 = scalar_select %p436, %s18, 1
      %p438 = scmp.lt.s32.totalorder %s435, 1
      %s439 = scalar_select %p438, %s435, 1
      %s440 = smul.addr %s437, 6
      %s441 = sadd.s32 %s439, %s440
      %s442 = smul.addr %s441, 8
      %s443 = scalar_lea.vmem %s3, %s442
      // Predicated region
      $region33: #{tpu_custom_call.1} parent=31 // pred_check
        %p444 = pneg %p121
      $region34: #{tpu_custom_call.1} parent=31 // pred_check_branch
        %446 = sbr.rel (%p444) target = $region36
      $region35: #{tpu_custom_call.1} parent=31 // pred_region
        %s447 = smul.u32 2, %s19
      $region36: #{tpu_custom_call.1} parent=31 // pred_fallthru
        _
    $region32: #{tpu_custom_call.1} parent=5 // pred_fallthru
      _
    %p448 = scmp.le.s32.totalorder 2, %s9
    // Predicated region
    $region37: #{tpu_custom_call.1} parent=5 // pred_check
      %p449 = pneg %p448
    $region38: #{tpu_custom_call.1} parent=5 // pred_check_branch
      %451 = sbr.rel (%p449) target = $region40
    $region39: #{tpu_custom_call.1} parent=5 // pred_region
      %s452 = ssub.s32 %s9, 2
      // Predicated region
      $region41: #{tpu_custom_call.1} parent=39 // pred_check
        %p453 = pneg %p127
      $region42: #{tpu_custom_call.1} parent=39 // pred_check_branch
        %455 = sbr.rel (%p453) target = $region44
      $region43: #{tpu_custom_call.1} parent=39 // pred_region
        %s456 = smul.u32 2, %s21
        %p457 = scmp.lt.s32.totalorder %s20, 1
        %s458 = scalar_select %p457, %s20, 1
        %p459 = scmp.lt.s32.totalorder %s456, 1
        %s460 = scalar_select %p459, %s456, 1
        %s461 = smul.addr %s458, 6
        %s462 = sadd.s32 %s460, %s461
        %s463 = smul.addr %s462, 8
        %s464 = scalar_lea.vmem %s3, %s463
      $region44: #{tpu_custom_call.1} parent=39 // pred_fallthru
        _
    $region40: #{tpu_custom_call.1} parent=5 // pred_fallthru
      _
  $region6: #{tpu_custom_call.1} parent=0 // loop_footer
    %s13 = sadd.s32 1, %s9
  $region7: #{tpu_custom_call.1} parent=0 // loop_footer_branch
    %8 = sbr.rel target = $region3
  $region8: #{tpu_custom_call.1} parent=0 // loop_exit
    _

</llo_original>
